<compile_context>
chip_gen: v7x
topology: tpu7x:2x2x1
jax: 0.10.0
libtpu: 0.0.40
codegen_flags: <defaults>
</compile_context>

<pallas_src>
import jax
import jax.numpy as jnp
from jax.experimental import pallas as pl
from jax.experimental.pallas import tpu as pltpu

_BN_EPS = 1e-5
_LANE = 128


def _round_up(x, m):
  return (x + m - 1) // m * m


# ------------------------- per-generation tiling ---------------------------- #

def _tpu_tiling():
  """(tm_cap, tk_cap, vmem_limit_bytes) chosen from the detected TPU."""
  vmem_bytes = 64 * 1024 * 1024                      # conservative default (v7x)
  try:
    info = pltpu.get_tpu_info()
    for attr in ("vmem_capacity_bytes", "vmem_bytes", "vmem_size_bytes"):
      v = getattr(info, attr, None)
      if v:
        vmem_bytes = int(v)
        break
  except Exception:
    pass
  if vmem_bytes >= 100 * 1024 * 1024:                # v5e / v6e (128 MiB VMEM)
    return 1024, 1024, 96 * 1024 * 1024
  return 1024, 1024, 44 * 1024 * 1024                # v7x (64 MiB VMEM)


def _choose_m_tiling(M, tm_cap):
  tm = min(_round_up(M, _LANE), tm_cap)
  # Keep >= 2 M blocks when M allows so the 'parallel' grid axis can be
  # sharded across both TensorCores on dual-core parts (v7x); essentially free
  # on single-core chips.
  if M > _LANE and _round_up(M, tm) // tm < 2:
    tm = _round_up(-(-M // 2), _LANE)
  return tm, _round_up(M, tm)


def _choose_k_tiling(K, tk_cap):
  """tk divides the padded K exactly (no wasted all-zero K blocks)."""
  kmin = _round_up(K, _LANE)
  nk = -(-kmin // tk_cap)
  tk = _round_up(-(-kmin // nk), _LANE)
  return tk, tk * nk


# ------------------------------ Pallas kernels ------------------------------ #

def _pass1_kernel(p_ref, w_ref, y_ref, st_ref, acc_ref):
  """y[i] = sum_k p[i,k] @ w[k]  (bf16 MXU, f32 acc), + per-tile channel stats.

  The weight is VMEM-resident: w_ref holds the full (kpad, cpad) weight and the
  kernel slices the current k-chunk."""
  k = pl.program_id(1)
  tk = p_ref.shape[1]

  @pl.when(k == 0)
  def _():
    acc_ref[...] = jnp.zeros_like(acc_ref)

  k0 = pl.multiple_of(k * tk, _LANE)
  acc_ref[...] += jnp.dot(p_ref[...], w_ref[pl.ds(k0, tk), :],
                          preferred_element_type=jnp.float32)

  @pl.when(k == pl.num_programs(1) - 1)
  def _():
    y = acc_ref[...]                                   # f32 accumulator
    y_ref[...] = y.astype(y_ref.dtype)                 # bf16 HBM intermediate
    st_ref[0:1, :] = jnp.sum(y, axis=0, keepdims=True)
    st_ref[1:2, :] = jnp.sum(y * y, axis=0, keepdims=True)


def _pass1_ds_kernel(p_ref, w_ref, xd_ref, wd_ref, y_ref, yd_ref, st_ref,
                     std_ref, acc_ref):
  """As _pass1_kernel, plus the fused 1x1 stride-s downsample conv, contracted
  compactly (strided center-tap activation @ (Cin_pad, Cout_pad) weight) once
  per M tile in the epilogue."""
  k = pl.program_id(1)
  tk = p_ref.shape[1]

  @pl.when(k == 0)
  def _():
    acc_ref[...] = jnp.zeros_like(acc_ref)

  k0 = pl.multiple_of(k * tk, _LANE)
  acc_ref[...] += jnp.dot(p_ref[...], w_ref[pl.ds(k0, tk), :],
                          preferred_element_type=jnp.float32)

  @pl.when(k == pl.num_programs(1) - 1)
  def _():
    y = acc_ref[...]
    y_ref[...] = y.astype(y_ref.dtype)
    st_ref[0:1, :] = jnp.sum(y, axis=0, keepdims=True)
    st_ref[1:2, :] = jnp.sum(y * y, axis=0, keepdims=True)
    # Compact fused downsample (one small matmul per M tile).
    yd = jnp.dot(xd_ref[...], wd_ref[...], preferred_element_type=jnp.float32)
    yd_ref[...] = yd.astype(yd_ref.dtype)
    std_ref[0:1, :] = jnp.sum(yd, axis=0, keepdims=True)
    std_ref[1:2, :] = jnp.sum(yd * yd, axis=0, keepdims=True)


def _bn_relu_kernel(y_ref, sc_ref, sh_ref, o_ref):
  o_ref[...] = jnp.maximum(y_ref[...] * sc_ref[...] + sh_ref[...],
                           0.0).astype(o_ref.dtype)


def _bn_relu_residual_kernel(y_ref, id_ref, sc_ref, sh_ref, scd_ref, shd_ref,
                             o_ref):
  out = jnp.maximum(y_ref[...] * sc_ref[...] + sh_ref[...], 0.0)
  idn = id_ref[...] * scd_ref[...] + shd_ref[...]
  o_ref[...] = jnp.maximum(out + idn, 0.0).astype(o_ref.dtype)


# ----------------------------- pallas_call wrappers ------------------------- #

def _conv_pass1(p, w, xd, wd, *, tm, tk, vmem_limit):
  mpad, kpad = p.shape
  cpad = w.shape[1]
  nm, nk = mpad // tm, kpad // tk
  cp = pltpu.CompilerParams(dimension_semantics=("parallel", "arbitrary"),
                            vmem_limit_bytes=vmem_limit)
  p_spec = pl.BlockSpec((tm, tk), lambda i, k: (i, k))
  w_spec = pl.BlockSpec((kpad, cpad), lambda i, k: (0, 0))   # VMEM-resident
  y_spec = pl.BlockSpec((tm, cpad), lambda i, k: (i, 0))
  st_spec = pl.BlockSpec((8, cpad), lambda i, k: (i, 0))
  y_shape = jax.ShapeDtypeStruct((mpad, cpad), jnp.bfloat16)
  st_shape = jax.ShapeDtypeStruct((nm * 8, cpad), jnp.float32)
  scratch = [pltpu.VMEM((tm, cpad), jnp.float32)]
  if wd is None:
    return pl.pallas_call(
        _pass1_kernel,
        grid=(nm, nk),
        in_specs=[p_spec, w_spec],
        out_specs=(y_spec, st_spec),
        out_shape=(y_shape, st_shape),
        scratch_shapes=scratch,
        compiler_params=cp,
    )(p, w)
  cinp = xd.shape[1]
  xd_spec = pl.BlockSpec((tm, cinp), lambda i, k: (i, 0))
  wd_spec = pl.BlockSpec((cinp, cpad), lambda i, k: (0, 0))  # VMEM-resident
  return pl.pallas_call(
      _pass1_ds_kernel,
      grid=(nm, nk),
      in_specs=[p_spec, w_spec, xd_spec, wd_spec],
      out_specs=(y_spec, y_spec, st_spec, st_spec),
      out_shape=(y_shape, y_shape, st_shape, st_shape),
      scratch_shapes=scratch,
      compiler_params=cp,
  )(p, w, xd, wd)


def _bn_apply(y, scale, shift, out_dtype, *, tm, vmem_limit):
  mpad, cpad = y.shape
  nm = mpad // tm
  cp = pltpu.CompilerParams(dimension_semantics=("parallel",),
                            vmem_limit_bytes=vmem_limit)
  vec = pl.BlockSpec((1, cpad), lambda i: (0, 0))
  tile = pl.BlockSpec((tm, cpad), lambda i: (i, 0))
  return pl.pallas_call(
      _bn_relu_kernel,
      grid=(nm,),
      in_specs=[tile, vec, vec],
      out_specs=tile,
      out_shape=jax.ShapeDtypeStruct((mpad, cpad), out_dtype),
      compiler_params=cp,
  )(y, scale, shift)


def _bn_residual_apply(y, idn, sc, sh, scd, shd, *, tm, vmem_limit):
  mpad, cpad = y.shape
  nm = mpad // tm
  cp = pltpu.CompilerParams(dimension_semantics=("parallel",),
                            vmem_limit_bytes=vmem_limit)
  vec = pl.BlockSpec((1, cpad), lambda i: (0, 0))
  tile = pl.BlockSpec((tm, cpad), lambda i: (i, 0))
  return pl.pallas_call(
      _bn_relu_residual_kernel,
      grid=(nm,),
      in_specs=[tile, tile, vec, vec, vec, vec],
      out_specs=tile,
      out_shape=jax.ShapeDtypeStruct((mpad, cpad), jnp.float32),
      compiler_params=cp,
  )(y, idn, sc, sh, scd, shd)


# --------------------------------- JAX glue --------------------------------- #

def _im2col(x_nhwc, k, s, pad):
  """k x k patches with stride s -> ((N*Ho*Wo, k*k*C), (Ho, Wo))."""
  xp = jnp.pad(x_nhwc, ((0, 0), (pad, pad), (pad, pad), (0, 0)))
  N, Hp, Wp, C = xp.shape
  Ho = (Hp - k) // s + 1
  Wo = (Wp - k) // s + 1
  cols = []
  for dy in range(k):
    for dx in range(k):
      cols.append(xp[:, dy:dy + (Ho - 1) * s + 1:s,
                     dx:dx + (Wo - 1) * s + 1:s, :])
  p = jnp.stack(cols, axis=3)                        # (N, Ho, Wo, k*k, C)
  return p.reshape(N * Ho * Wo, k * k * C), (Ho, Wo)


def _pad2d(a, rows, cols):
  r, c = a.shape
  return jnp.pad(a, ((0, rows - r), (0, cols - c)))


def _pad1(v, n):
  return jnp.pad(v.astype(jnp.float32), (0, n - v.shape[0]))


def _bn_scale_shift(stats, m_true, gamma, beta, eps=_BN_EPS):
  """Fold per-tile batch stats + affine params into one scale/shift pair."""
  st = stats.reshape(-1, 8, stats.shape[-1])
  s = jnp.sum(st[:, 0, :], axis=0)
  ss = jnp.sum(st[:, 1, :], axis=0)
  mean = s / m_true
  # TODO(synk): Welford/Chan per-tile combine to avoid E[x^2]-E[x]^2
  # cancellation for very large M; fine in f32 at these scales.
  var = jnp.maximum(ss / m_true - mean * mean, 0.0)
  scale = gamma * jax.lax.rsqrt(var + eps)
  shift = beta - mean * scale
  return scale.reshape(1, -1), shift.reshape(1, -1)


def init_params(key, in_channel, out_channel, s):
  k1, k2, kd = jax.random.split(key, 3)
  params = {
      # conv weights, PyTorch layout (Cout, Cin, KH, KW)
      "w1": jax.random.normal(k1, (out_channel, in_channel, 3, 3),
                              jnp.float32) * (2.0 / (in_channel * 9)) ** 0.5,
      "w2": jax.random.normal(k2, (out_channel, out_channel, 3, 3),
                              jnp.float32) * (2.0 / (out_channel * 9)) ** 0.5,
      # BatchNorm affine params (nn.BatchNorm2d default init)
      "g1": jnp.ones((out_channel,), jnp.float32),
      "b1": jnp.zeros((out_channel,), jnp.float32),
      "g2": jnp.ones((out_channel,), jnp.float32),
      "b2": jnp.zeros((out_channel,), jnp.float32),
  }
  if s != 1 or in_channel != out_channel:
    params["wd"] = jax.random.normal(
        kd, (out_channel, in_channel, 1, 1),
        jnp.float32) * (2.0 / in_channel) ** 0.5
    params["gd"] = jnp.ones((out_channel,), jnp.float32)
    params["bd"] = jnp.zeros((out_channel,), jnp.float32)
  return params


def basic_block_forward(x_nchw, params, s):
  tm_cap, tk_cap, vmem_limit = _tpu_tiling()
  x = jnp.transpose(x_nchw, (0, 2, 3, 1)).astype(jnp.bfloat16)   # NHWC bf16
  N, H, W, Cin = x.shape
  w1, w2 = params["w1"], params["w2"]
  Cout = w1.shape[0]
  cpad = _round_up(Cout, _LANE)
  has_ds = "wd" in params

  # ---- conv1 (3x3, stride s, pad 1): pass 1 (+ fused 1x1 downsample) ------- #
  p1, (Ho, Wo) = _im2col(x, 3, s, 1)
  M = N * Ho * Wo
  K1 = 9 * Cin
  tm, mpad = _choose_m_tiling(M, tm_cap)
  tk1, k1pad = _choose_k_tiling(K1, tk_cap)
  p1p = _pad2d(p1, mpad, k1pad)                                   # bf16
  w1m = jnp.transpose(w1, (2, 3, 1, 0)).reshape(K1, Cout)
  w1p = _pad2d(w1m, k1pad, cpad).astype(jnp.bfloat16)

  if has_ds:
    cinp = _round_up(Cin, _LANE)
    # Strided center-tap activation: exactly the 1x1 stride-s conv's input,
    # row-aligned with the 3x3 conv's output rows.
    xd = x[:, ::s, ::s, :].reshape(M, Cin)
    xdp = _pad2d(xd, mpad, cinp)
    wdm = params["wd"].reshape(Cout, Cin).T                       # (Cin, Cout)
    wdp = _pad2d(wdm, cinp, cpad).astype(jnp.bfloat16)
    y1, yd, st1, std = _conv_pass1(p1p, w1p, xdp, wdp, tm=tm, tk=tk1,
                                   vmem_limit=vmem_limit)
    scd, shd = _bn_scale_shift(std, M, _pad1(params["gd"], cpad),
                               _pad1(params["bd"], cpad))
  else:
    y1, st1 = _conv_pass1(p1p, w1p, None, None, tm=tm, tk=tk1,
                          vmem_limit=vmem_limit)
    yd = _pad2d(x.reshape(M, Cin), mpad, cpad)                    # identity = x
    scd = jnp.ones((1, cpad), jnp.float32)
    shd = jnp.zeros((1, cpad), jnp.float32)

  # ---- pass 2: BN1 + ReLU on conv1 output (bf16 for the next matmul) ------- #
  sc1, sh1 = _bn_scale_shift(st1, M, _pad1(params["g1"], cpad),
                             _pad1(params["b1"], cpad))
  a1 = _bn_apply(y1, sc1, sh1, jnp.bfloat16, tm=tm, vmem_limit=vmem_limit)
  # TODO(synk): fold this slice/reshape + im2col into an in-kernel halo'd conv
  # for conv2 to drop the extra XLA memory passes.
  a1 = a1[:M, :Cout].reshape(N, Ho, Wo, Cout)

  # ---- conv2 (3x3, stride 1, pad 1): pass 1 --------------------------------- #
  p2, _ = _im2col(a1, 3, 1, 1)
  K2 = 9 * Cout
  tk2, k2pad = _choose_k_tiling(K2, tk_cap)
  p2p = _pad2d(p2, mpad, k2pad)                                   # bf16
  w2m = jnp.transpose(w2, (2, 3, 1, 0)).reshape(K2, Cout)
  w2p = _pad2d(w2m, k2pad, cpad).astype(jnp.bfloat16)
  y2, st2 = _conv_pass1(p2p, w2p, None, None, tm=tm, tk=tk2,
                        vmem_limit=vmem_limit)

  # ---- pass 2: ReLU(BN2(conv2)) + BN(identity) + add + final ReLU (fused) --- #
  sc2, sh2 = _bn_scale_shift(st2, M, _pad1(params["g2"], cpad),
                             _pad1(params["b2"], cpad))
  out = _bn_residual_apply(y2, yd, sc2, sh2, scd, shd, tm=tm,
                           vmem_limit=vmem_limit)
  out = out[:M, :Cout].reshape(N, Ho, Wo, Cout)
  return jnp.transpose(out, (0, 3, 1, 2))                         # back to NCHW


# ------------------------------ pure-JAX reference --------------------------- #

def _ref_forward(x, params, s):
  def conv(x_nchw, w, stride, pad):
    return jax.lax.conv_general_dilated(
        x_nchw, w, window_strides=(stride, stride),
        padding=[(pad, pad), (pad, pad)],
        dimension_numbers=("NCHW", "OIHW", "NCHW"))

  def bn(y, g, b):
    mean = jnp.mean(y, axis=(0, 2, 3), keepdims=True)
    var = jnp.var(y, axis=(0, 2, 3), keepdims=True)      # biased, like torch
    return ((y - mean) * jax.lax.rsqrt(var + _BN_EPS)
            * g.reshape(1, -1, 1, 1) + b.reshape(1, -1, 1, 1))

  out = jax.nn.relu(bn(conv(x, params["w1"], s, 1), params["g1"], params["b1"]))
  out = jax.nn.relu(bn(conv(out, params["w2"], 1, 1), params["g2"], params["b2"]))
  if "wd" in params:
    idn = bn(conv(x, params["wd"], s, 0), params["gd"], params["bd"])
  else:
    idn = x
  return jax.nn.relu(out + idn)


if __name__ == "__main__":
  key = jax.random.PRNGKey(0)
  kp, kx = jax.random.split(key)
  fwd = jax.jit(basic_block_forward, static_argnums=2)

  # Case 1: downsample branch active (stride 2, channel expansion).
  N, Cin, Cout, H, W, s = 2, 4, 8, 16, 16, 2
  params = init_params(kp, Cin, Cout, s)
  x = jax.random.normal(kx, (N, Cin, H, W), jnp.float32)
  out = fwd(x, params, s)
  jax.block_until_ready(out)
  assert out.shape == (N, Cout, H // s, W // s)
  ref = _ref_forward(x, params, s)
  err = float(jnp.max(jnp.abs(out - ref)) / (jnp.max(jnp.abs(ref)) + 1e-6))
  assert err < 0.1, f"case1 relative error too large: {err}"

  # Case 2: identity branch (stride 1, same channels).
  params2 = init_params(kp, Cout, Cout, 1)
  x2 = jax.random.normal(kx, (N, Cout, H, W), jnp.float32)
  out2 = fwd(x2, params2, 1)
  jax.block_until_ready(out2)
  assert out2.shape == (N, Cout, H, W)
  ref2 = _ref_forward(x2, params2, 1)
  err2 = float(jnp.max(jnp.abs(out2 - ref2)) / (jnp.max(jnp.abs(ref2)) + 1e-6))
  assert err2 < 0.1, f"case2 relative error too large: {err2}"

  print("KERNEL_OK")
</pallas_src>

<mosaic_0001>
module attributes {stable_mosaic.version = 11 : i64} {
  func.func @_bn_relu_kernel(%arg0: i32, %arg1: memref<128x128xbf16, #tpu.memory_space<vmem>>, %arg2: memref<1x128xf32, #tpu.memory_space<vmem>>, %arg3: memref<1x128xf32, #tpu.memory_space<vmem>>, %arg4: memref<128x128xbf16, #tpu.memory_space<vmem>>) attributes {dimension_semantics = [#tpu.dimension_semantics<parallel>], iteration_bounds = array<i64: 1>, scalar_prefetch = 0 : i64, scratch_operands = 0 : i64, tpu.core_type = #tpu.core_type<tc>, window_params = [{transform_indices = @transform_0, window_bounds = array<i64: 128, 128>}, {pipeline_mode = #tpu.pipeline_mode<synchronous>, transform_indices = @transform_1, window_bounds = array<i64: 1, 128>}, {pipeline_mode = #tpu.pipeline_mode<synchronous>, transform_indices = @transform_2, window_bounds = array<i64: 1, 128>}, {transform_indices = @transform_3, window_bounds = array<i64: 128, 128>}]} {
    %c0 = arith.constant 0 : index
    %c0_0 = arith.constant 0 : index
    %0 = vector.load %arg1[%c0, %c0_0] : memref<128x128xbf16, #tpu.memory_space<vmem>>, vector<128x128xbf16>
    %c0_1 = arith.constant 0 : index
    %c0_2 = arith.constant 0 : index
    %1 = vector.load %arg2[%c0_1, %c0_2] : memref<1x128xf32, #tpu.memory_space<vmem>>, vector<1x128xf32>
    %2 = arith.extf %0 : vector<128x128xbf16> to vector<128x128xf32>
    %3 = vector.broadcast %1 : vector<1x128xf32> to vector<128x128xf32>
    %4 = arith.mulf %2, %3 : vector<128x128xf32>
    %c0_3 = arith.constant 0 : index
    %c0_4 = arith.constant 0 : index
    %5 = vector.load %arg3[%c0_3, %c0_4] : memref<1x128xf32, #tpu.memory_space<vmem>>, vector<1x128xf32>
    %6 = vector.broadcast %5 : vector<1x128xf32> to vector<128x128xf32>
    %7 = arith.addf %4, %6 : vector<128x128xf32>
    %cst = arith.constant 0.000000e+00 : f32
    %8 = vector.broadcast %cst : f32 to vector<128x128xf32>
    %9 = arith.maximumf %7, %8 : vector<128x128xf32>
    %10 = arith.truncf %9 : vector<128x128xf32> to vector<128x128xbf16>
    %c0_5 = arith.constant 0 : index
    %c0_6 = arith.constant 0 : index
    %11 = vector.load %arg4[%c0_5, %c0_6] : memref<128x128xbf16, #tpu.memory_space<vmem>>, vector<128x128xbf16>
    tpu.vector_store %arg4[%c0_5, %c0_6], %10 {strides = array<i32>} : memref<128x128xbf16, #tpu.memory_space<vmem>>, vector<128x128xbf16>,
    return
  }
  func.func @transform_0(%arg0: i32) -> (i32, i32) {
    %c0_i32 = arith.constant 0 : i32
    %c0_i32_0 = arith.constant 0 : i32
    return %arg0, %c0_i32 : i32, i32
  }
  func.func @transform_1(%arg0: i32) -> (i32, i32) {
    %c0_i32 = arith.constant 0 : i32
    %c0_i32_0 = arith.constant 0 : i32
    %c0_i32_1 = arith.constant 0 : i32
    return %c0_i32, %c0_i32_0 : i32, i32
  }
  func.func @transform_2(%arg0: i32) -> (i32, i32) {
    %c0_i32 = arith.constant 0 : i32
    %c0_i32_0 = arith.constant 0 : i32
    %c0_i32_1 = arith.constant 0 : i32
    return %c0_i32, %c0_i32_0 : i32, i32
  }
  func.func @transform_3(%arg0: i32) -> (i32, i32) {
    %c0_i32 = arith.constant 0 : i32
    %c0_i32_0 = arith.constant 0 : i32
    return %arg0, %c0_i32 : i32, i32
  }
}

module attributes {stable_mosaic.version = 11 : i64} {
  func.func @_pass1_ds_kernel(%arg0: i32, %arg1: i32, %arg2: memref<128x128xbf16, #tpu.memory_space<vmem>>, %arg3: memref<128x128xbf16, #tpu.memory_space<vmem>>, %arg4: memref<128x128xbf16, #tpu.memory_space<vmem>>, %arg5: memref<128x128xbf16, #tpu.memory_space<vmem>>, %arg6: memref<128x128xbf16, #tpu.memory_space<vmem>>, %arg7: memref<128x128xbf16, #tpu.memory_space<vmem>>, %arg8: memref<8x128xf32, #tpu.memory_space<vmem>>, %arg9: memref<8x128xf32, #tpu.memory_space<vmem>>, %arg10: memref<128x128xf32, #tpu.memory_space<vmem>>) attributes {dimension_semantics = [#tpu.dimension_semantics<parallel>, #tpu.dimension_semantics<arbitrary>], iteration_bounds = array<i64: 1, 1>, scalar_prefetch = 0 : i64, scratch_operands = 1 : i64, tpu.core_type = #tpu.core_type<tc>, window_params = [{transform_indices = @transform_0, window_bounds = array<i64: 128, 128>}, {pipeline_mode = #tpu.pipeline_mode<synchronous>, transform_indices = @transform_1, window_bounds = array<i64: 128, 128>}, {transform_indices = @transform_2, window_bounds = array<i64: 128, 128>}, {pipeline_mode = #tpu.pipeline_mode<synchronous>, transform_indices = @transform_3, window_bounds = array<i64: 128, 128>}, {transform_indices = @transform_4, window_bounds = array<i64: 128, 128>}, {transform_indices = @transform_5, window_bounds = array<i64: 128, 128>}, {transform_indices = @transform_6, window_bounds = array<i64: 8, 128>}, {transform_indices = @transform_7, window_bounds = array<i64: 8, 128>}]} {
    %c0_i32 = arith.constant 0 : i32
    %0 = arith.cmpi eq, %arg1, %c0_i32 : i32
    %1 = arith.extui %0 : i1 to i32
    %c0_i32_0 = arith.constant 0 : i32
    %2 = arith.cmpi ne, %1, %c0_i32_0 : i32
    scf.if %2 {
      %cst_9 = arith.constant 0.000000e+00 : f32
      %15 = vector.broadcast %cst_9 : f32 to vector<128x128xf32>
      %c0_10 = arith.constant 0 : index
      %c0_11 = arith.constant 0 : index
      %16 = vector.load %arg10[%c0_10, %c0_11] : memref<128x128xf32, #tpu.memory_space<vmem>>, vector<128x128xf32>
      tpu.vector_store %arg10[%c0_10, %c0_11], %15 {strides = array<i32>} : memref<128x128xf32, #tpu.memory_space<vmem>>, vector<128x128xf32>,
    } else {
    }
    %c128_i32 = arith.constant 128 : i32
    %3 = arith.muli %arg1, %c128_i32 : i32
    %4 = tpu.assume_multiple %3, 128 : i32
    %c0 = arith.constant 0 : index
    %c0_1 = arith.constant 0 : index
    %5 = vector.load %arg10[%c0, %c0_1] : memref<128x128xf32, #tpu.memory_space<vmem>>, vector<128x128xf32>
    %c0_2 = arith.constant 0 : index
    %c0_3 = arith.constant 0 : index
    %6 = vector.load %arg2[%c0_2, %c0_3] : memref<128x128xbf16, #tpu.memory_space<vmem>>, vector<128x128xbf16>
    %7 = arith.index_cast %4 : i32 to index
    %c0_4 = arith.constant 0 : index
    %8 = vector.load %arg3[%7, %c0_4] : memref<128x128xbf16, #tpu.memory_space<vmem>>, vector<128x128xbf16>
    %cst = arith.constant dense<0.000000e+00> : vector<128x128xf32>
    %9 = tpu.matmul %6, %8, %cst {dimension_numbers = #tpu.dot_dimension_numbers<[1], [0], [0], [1], [0, 0, 1, 1], [], []>} : vector<128x128xbf16>, vector<128x128xbf16>, vector<128x128xf32> -> vector<128x128xf32>
    %10 = arith.addf %5, %9 : vector<128x128xf32>
    %c0_5 = arith.constant 0 : index
    %c0_6 = arith.constant 0 : index
    %11 = vector.load %arg10[%c0_5, %c0_6] : memref<128x128xf32, #tpu.memory_space<vmem>>, vector<128x128xf32>
    tpu.vector_store %arg10[%c0_5, %c0_6], %10 {strides = array<i32>} : memref<128x128xf32, #tpu.memory_space<vmem>>, vector<128x128xf32>,
    %c0_i32_7 = arith.constant 0 : i32
    %12 = arith.cmpi eq, %arg1, %c0_i32_7 : i32
    %13 = arith.extui %12 : i1 to i32
    %c0_i32_8 = arith.constant 0 : i32
    %14 = arith.cmpi ne, %13, %c0_i32_8 : i32
    scf.if %14 {
      %c0_9 = arith.constant 0 : index
      %c0_10 = arith.constant 0 : index
      %15 = vector.load %arg10[%c0_9, %c0_10] : memref<128x128xf32, #tpu.memory_space<vmem>>, vector<128x128xf32>
      %16 = arith.truncf %15 : vector<128x128xf32> to vector<128x128xbf16>
      %c0_11 = arith.constant 0 : index
      %c0_12 = arith.constant 0 : index
      %17 = vector.load %arg6[%c0_11, %c0_12] : memref<128x128xbf16, #tpu.memory_space<vmem>>, vector<128x128xbf16>
      tpu.vector_store %arg6[%c0_11, %c0_12], %16 {strides = array<i32>} : memref<128x128xbf16, #tpu.memory_space<vmem>>, vector<128x128xbf16>,
      %cst_13 = arith.constant dense<0.000000e+00> : vector<128xf32>
      %18 = vector.multi_reduction <add>, %15, %cst_13 [0] : vector<128x128xf32> to vector<128xf32>
      %19 = vector.shape_cast %18 : vector<128xf32> to vector<1x128xf32>
      %c0_14 = arith.constant 0 : index
      %c0_15 = arith.constant 0 : index
      %20 = vector.load %arg8[%c0_14, %c0_15] : memref<8x128xf32, #tpu.memory_space<vmem>>, vector<1x128xf32>
      tpu.vector_store %arg8[%c0_14, %c0_15], %19 {strides = array<i32>} : memref<8x128xf32, #tpu.memory_space<vmem>>, vector<1x128xf32>,
      %21 = arith.mulf %15, %15 : vector<128x128xf32>
      %cst_16 = arith.constant dense<0.000000e+00> : vector<128xf32>
      %22 = vector.multi_reduction <add>, %21, %cst_16 [0] : vector<128x128xf32> to vector<128xf32>
      %23 = vector.shape_cast %22 : vector<128xf32> to vector<1x128xf32>
      %c1 = arith.constant 1 : index
      %c0_17 = arith.constant 0 : index
      %24 = vector.load %arg8[%c1, %c0_17] : memref<8x128xf32, #tpu.memory_space<vmem>>, vector<1x128xf32>
      tpu.vector_store %arg8[%c1, %c0_17], %23 {strides = array<i32>} : memref<8x128xf32, #tpu.memory_space<vmem>>, vector<1x128xf32>,
      %c0_18 = arith.constant 0 : index
      %c0_19 = arith.constant 0 : index
      %25 = vector.load %arg4[%c0_18, %c0_19] : memref<128x128xbf16, #tpu.memory_space<vmem>>, vector<128x128xbf16>
      %c0_20 = arith.constant 0 : index
      %c0_21 = arith.constant 0 : index
      %26 = vector.load %arg5[%c0_20, %c0_21] : memref<128x128xbf16, #tpu.memory_space<vmem>>, vector<128x128xbf16>
      %cst_22 = arith.constant dense<0.000000e+00> : vector<128x128xf32>
      %27 = tpu.matmul %25, %26, %cst_22 {dimension_numbers = #tpu.dot_dimension_numbers<[1], [0], [0], [1], [0, 0, 1, 1], [], []>} : vector<128x128xbf16>, vector<128x128xbf16>, vector<128x128xf32> -> vector<128x128xf32>
      %28 = arith.truncf %27 : vector<128x128xf32> to vector<128x128xbf16>
      %c0_23 = arith.constant 0 : index
      %c0_24 = arith.constant 0 : index
      %29 = vector.load %arg7[%c0_23, %c0_24] : memref<128x128xbf16, #tpu.memory_space<vmem>>, vector<128x128xbf16>
      tpu.vector_store %arg7[%c0_23, %c0_24], %28 {strides = array<i32>} : memref<128x128xbf16, #tpu.memory_space<vmem>>, vector<128x128xbf16>,
      %cst_25 = arith.constant dense<0.000000e+00> : vector<128xf32>
      %30 = vector.multi_reduction <add>, %27, %cst_25 [0] : vector<128x128xf32> to vector<128xf32>
      %31 = vector.shape_cast %30 : vector<128xf32> to vector<1x128xf32>
      %c0_26 = arith.constant 0 : index
      %c0_27 = arith.constant 0 : index
      %32 = vector.load %arg9[%c0_26, %c0_27] : memref<8x128xf32, #tpu.memory_space<vmem>>, vector<1x128xf32>
      tpu.vector_store %arg9[%c0_26, %c0_27], %31 {strides = array<i32>} : memref<8x128xf32, #tpu.memory_space<vmem>>, vector<1x128xf32>,
      %33 = arith.mulf %27, %27 : vector<128x128xf32>
      %cst_28 = arith.constant dense<0.000000e+00> : vector<128xf32>
      %34 = vector.multi_reduction <add>, %33, %cst_28 [0] : vector<128x128xf32> to vector<128xf32>
      %35 = vector.shape_cast %34 : vector<128xf32> to vector<1x128xf32>
      %c1_29 = arith.constant 1 : index
      %c0_30 = arith.constant 0 : index
      %36 = vector.load %arg9[%c1_29, %c0_30] : memref<8x128xf32, #tpu.memory_space<vmem>>, vector<1x128xf32>
      tpu.vector_store %arg9[%c1_29, %c0_30], %35 {strides = array<i32>} : memref<8x128xf32, #tpu.memory_space<vmem>>, vector<1x128xf32>,
    } else {
    }
    return
  }
  func.func @transform_0(%arg0: i32, %arg1: i32) -> (i32, i32) {
    %c0_i32 = arith.constant 0 : i32
    return %arg0, %arg1 : i32, i32
  }
  func.func @transform_1(%arg0: i32, %arg1: i32) -> (i32, i32) {
    %c0_i32 = arith.constant 0 : i32
    %c0_i32_0 = arith.constant 0 : i32
    %c0_i32_1 = arith.constant 0 : i32
    return %c0_i32, %c0_i32_0 : i32, i32
  }
  func.func @transform_2(%arg0: i32, %arg1: i32) -> (i32, i32) {
    %c0_i32 = arith.constant 0 : i32
    %c0_i32_0 = arith.constant 0 : i32
    return %arg0, %c0_i32 : i32, i32
  }
  func.func @transform_3(%arg0: i32, %arg1: i32) -> (i32, i32) {
    %c0_i32 = arith.constant 0 : i32
    %c0_i32_0 = arith.constant 0 : i32
    %c0_i32_1 = arith.constant 0 : i32
    return %c0_i32, %c0_i32_0 : i32, i32
  }
  func.func @transform_4(%arg0: i32, %arg1: i32) -> (i32, i32) {
    %c0_i32 = arith.constant 0 : i32
    %c0_i32_0 = arith.constant 0 : i32
    return %arg0, %c0_i32 : i32, i32
  }
  func.func @transform_5(%arg0: i32, %arg1: i32) -> (i32, i32) {
    %c0_i32 = arith.constant 0 : i32
    %c0_i32_0 = arith.constant 0 : i32
    return %arg0, %c0_i32 : i32, i32
  }
  func.func @transform_6(%arg0: i32, %arg1: i32) -> (i32, i32) {
    %c0_i32 = arith.constant 0 : i32
    %c0_i32_0 = arith.constant 0 : i32
    return %arg0, %c0_i32 : i32, i32
  }
  func.func @transform_7(%arg0: i32, %arg1: i32) -> (i32, i32) {
    %c0_i32 = arith.constant 0 : i32
    %c0_i32_0 = arith.constant 0 : i32
    return %arg0, %c0_i32 : i32, i32
  }
}

module attributes {stable_mosaic.version = 11 : i64} {
  func.func @_pass1_kernel(%arg0: i32, %arg1: i32, %arg2: memref<128x128xbf16, #tpu.memory_space<vmem>>, %arg3: memref<128x128xbf16, #tpu.memory_space<vmem>>, %arg4: memref<128x128xbf16, #tpu.memory_space<vmem>>, %arg5: memref<8x128xf32, #tpu.memory_space<vmem>>, %arg6: memref<128x128xf32, #tpu.memory_space<vmem>>) attributes {dimension_semantics = [#tpu.dimension_semantics<parallel>, #tpu.dimension_semantics<arbitrary>], iteration_bounds = array<i64: 1, 1>, scalar_prefetch = 0 : i64, scratch_operands = 1 : i64, tpu.core_type = #tpu.core_type<tc>, window_params = [{transform_indices = @transform_0, window_bounds = array<i64: 128, 128>}, {pipeline_mode = #tpu.pipeline_mode<synchronous>, transform_indices = @transform_1, window_bounds = array<i64: 128, 128>}, {transform_indices = @transform_2, window_bounds = array<i64: 128, 128>}, {transform_indices = @transform_3, window_bounds = array<i64: 8, 128>}]} {
    %c0_i32 = arith.constant 0 : i32
    %0 = arith.cmpi eq, %arg1, %c0_i32 : i32
    %1 = arith.extui %0 : i1 to i32
    %c0_i32_0 = arith.constant 0 : i32
    %2 = arith.cmpi ne, %1, %c0_i32_0 : i32
    scf.if %2 {
      %cst_9 = arith.constant 0.000000e+00 : f32
      %15 = vector.broadcast %cst_9 : f32 to vector<128x128xf32>
      %c0_10 = arith.constant 0 : index
      %c0_11 = arith.constant 0 : index
      %16 = vector.load %arg6[%c0_10, %c0_11] : memref<128x128xf32, #tpu.memory_space<vmem>>, vector<128x128xf32>
      tpu.vector_store %arg6[%c0_10, %c0_11], %15 {strides = array<i32>} : memref<128x128xf32, #tpu.memory_space<vmem>>, vector<128x128xf32>,
    } else {
    }
    %c128_i32 = arith.constant 128 : i32
    %3 = arith.muli %arg1, %c128_i32 : i32
    %4 = tpu.assume_multiple %3, 128 : i32
    %c0 = arith.constant 0 : index
    %c0_1 = arith.constant 0 : index
    %5 = vector.load %arg6[%c0, %c0_1] : memref<128x128xf32, #tpu.memory_space<vmem>>, vector<128x128xf32>
    %c0_2 = arith.constant 0 : index
    %c0_3 = arith.constant 0 : index
    %6 = vector.load %arg2[%c0_2, %c0_3] : memref<128x128xbf16, #tpu.memory_space<vmem>>, vector<128x128xbf16>
    %7 = arith.index_cast %4 : i32 to index
    %c0_4 = arith.constant 0 : index
    %8 = vector.load %arg3[%7, %c0_4] : memref<128x128xbf16, #tpu.memory_space<vmem>>, vector<128x128xbf16>
    %cst = arith.constant dense<0.000000e+00> : vector<128x128xf32>
    %9 = tpu.matmul %6, %8, %cst {dimension_numbers = #tpu.dot_dimension_numbers<[1], [0], [0], [1], [0, 0, 1, 1], [], []>} : vector<128x128xbf16>, vector<128x128xbf16>, vector<128x128xf32> -> vector<128x128xf32>
    %10 = arith.addf %5, %9 : vector<128x128xf32>
    %c0_5 = arith.constant 0 : index
    %c0_6 = arith.constant 0 : index
    %11 = vector.load %arg6[%c0_5, %c0_6] : memref<128x128xf32, #tpu.memory_space<vmem>>, vector<128x128xf32>
    tpu.vector_store %arg6[%c0_5, %c0_6], %10 {strides = array<i32>} : memref<128x128xf32, #tpu.memory_space<vmem>>, vector<128x128xf32>,
    %c0_i32_7 = arith.constant 0 : i32
    %12 = arith.cmpi eq, %arg1, %c0_i32_7 : i32
    %13 = arith.extui %12 : i1 to i32
    %c0_i32_8 = arith.constant 0 : i32
    %14 = arith.cmpi ne, %13, %c0_i32_8 : i32
    scf.if %14 {
      %c0_9 = arith.constant 0 : index
      %c0_10 = arith.constant 0 : index
      %15 = vector.load %arg6[%c0_9, %c0_10] : memref<128x128xf32, #tpu.memory_space<vmem>>, vector<128x128xf32>
      %16 = arith.truncf %15 : vector<128x128xf32> to vector<128x128xbf16>
      %c0_11 = arith.constant 0 : index
      %c0_12 = arith.constant 0 : index
      %17 = vector.load %arg4[%c0_11, %c0_12] : memref<128x128xbf16, #tpu.memory_space<vmem>>, vector<128x128xbf16>
      tpu.vector_store %arg4[%c0_11, %c0_12], %16 {strides = array<i32>} : memref<128x128xbf16, #tpu.memory_space<vmem>>, vector<128x128xbf16>,
      %cst_13 = arith.constant dense<0.000000e+00> : vector<128xf32>
      %18 = vector.multi_reduction <add>, %15, %cst_13 [0] : vector<128x128xf32> to vector<128xf32>
      %19 = vector.shape_cast %18 : vector<128xf32> to vector<1x128xf32>
      %c0_14 = arith.constant 0 : index
      %c0_15 = arith.constant 0 : index
      %20 = vector.load %arg5[%c0_14, %c0_15] : memref<8x128xf32, #tpu.memory_space<vmem>>, vector<1x128xf32>
      tpu.vector_store %arg5[%c0_14, %c0_15], %19 {strides = array<i32>} : memref<8x128xf32, #tpu.memory_space<vmem>>, vector<1x128xf32>,
      %21 = arith.mulf %15, %15 : vector<128x128xf32>
      %cst_16 = arith.constant dense<0.000000e+00> : vector<128xf32>
      %22 = vector.multi_reduction <add>, %21, %cst_16 [0] : vector<128x128xf32> to vector<128xf32>
      %23 = vector.shape_cast %22 : vector<128xf32> to vector<1x128xf32>
      %c1 = arith.constant 1 : index
      %c0_17 = arith.constant 0 : index
      %24 = vector.load %arg5[%c1, %c0_17] : memref<8x128xf32, #tpu.memory_space<vmem>>, vector<1x128xf32>
      tpu.vector_store %arg5[%c1, %c0_17], %23 {strides = array<i32>} : memref<8x128xf32, #tpu.memory_space<vmem>>, vector<1x128xf32>,
    } else {
    }
    return
  }
  func.func @transform_0(%arg0: i32, %arg1: i32) -> (i32, i32) {
    %c0_i32 = arith.constant 0 : i32
    return %arg0, %arg1 : i32, i32
  }
  func.func @transform_1(%arg0: i32, %arg1: i32) -> (i32, i32) {
    %c0_i32 = arith.constant 0 : i32
    %c0_i32_0 = arith.constant 0 : i32
    %c0_i32_1 = arith.constant 0 : i32
    return %c0_i32, %c0_i32_0 : i32, i32
  }
  func.func @transform_2(%arg0: i32, %arg1: i32) -> (i32, i32) {
    %c0_i32 = arith.constant 0 : i32
    %c0_i32_0 = arith.constant 0 : i32
    return %arg0, %c0_i32 : i32, i32
  }
  func.func @transform_3(%arg0: i32, %arg1: i32) -> (i32, i32) {
    %c0_i32 = arith.constant 0 : i32
    %c0_i32_0 = arith.constant 0 : i32
    return %arg0, %c0_i32 : i32, i32
  }
}

module attributes {stable_mosaic.version = 11 : i64} {
  func.func @_bn_relu_residual_kernel(%arg0: i32, %arg1: memref<128x128xbf16, #tpu.memory_space<vmem>>, %arg2: memref<128x128xbf16, #tpu.memory_space<vmem>>, %arg3: memref<1x128xf32, #tpu.memory_space<vmem>>, %arg4: memref<1x128xf32, #tpu.memory_space<vmem>>, %arg5: memref<1x128xf32, #tpu.memory_space<vmem>>, %arg6: memref<1x128xf32, #tpu.memory_space<vmem>>, %arg7: memref<128x128xf32, #tpu.memory_space<vmem>>) attributes {dimension_semantics = [#tpu.dimension_semantics<parallel>], iteration_bounds = array<i64: 1>, scalar_prefetch = 0 : i64, scratch_operands = 0 : i64, tpu.core_type = #tpu.core_type<tc>, window_params = [{transform_indices = @transform_0, window_bounds = array<i64: 128, 128>}, {transform_indices = @transform_1, window_bounds = array<i64: 128, 128>}, {pipeline_mode = #tpu.pipeline_mode<synchronous>, transform_indices = @transform_2, window_bounds = array<i64: 1, 128>}, {pipeline_mode = #tpu.pipeline_mode<synchronous>, transform_indices = @transform_3, window_bounds = array<i64: 1, 128>}, {pipeline_mode = #tpu.pipeline_mode<synchronous>, transform_indices = @transform_4, window_bounds = array<i64: 1, 128>}, {pipeline_mode = #tpu.pipeline_mode<synchronous>, transform_indices = @transform_5, window_bounds = array<i64: 1, 128>}, {transform_indices = @transform_6, window_bounds = array<i64: 128, 128>}]} {
    %c0 = arith.constant 0 : index
    %c0_0 = arith.constant 0 : index
    %0 = vector.load %arg1[%c0, %c0_0] : memref<128x128xbf16, #tpu.memory_space<vmem>>, vector<128x128xbf16>
    %c0_1 = arith.constant 0 : index
    %c0_2 = arith.constant 0 : index
    %1 = vector.load %arg3[%c0_1, %c0_2] : memref<1x128xf32, #tpu.memory_space<vmem>>, vector<1x128xf32>
    %2 = arith.extf %0 : vector<128x128xbf16> to vector<128x128xf32>
    %3 = vector.broadcast %1 : vector<1x128xf32> to vector<128x128xf32>
    %4 = arith.mulf %2, %3 : vector<128x128xf32>
    %c0_3 = arith.constant 0 : index
    %c0_4 = arith.constant 0 : index
    %5 = vector.load %arg4[%c0_3, %c0_4] : memref<1x128xf32, #tpu.memory_space<vmem>>, vector<1x128xf32>
    %6 = vector.broadcast %5 : vector<1x128xf32> to vector<128x128xf32>
    %7 = arith.addf %4, %6 : vector<128x128xf32>
    %cst = arith.constant 0.000000e+00 : f32
    %8 = vector.broadcast %cst : f32 to vector<128x128xf32>
    %9 = arith.maximumf %7, %8 : vector<128x128xf32>
    %c0_5 = arith.constant 0 : index
    %c0_6 = arith.constant 0 : index
    %10 = vector.load %arg2[%c0_5, %c0_6] : memref<128x128xbf16, #tpu.memory_space<vmem>>, vector<128x128xbf16>
    %c0_7 = arith.constant 0 : index
    %c0_8 = arith.constant 0 : index
    %11 = vector.load %arg5[%c0_7, %c0_8] : memref<1x128xf32, #tpu.memory_space<vmem>>, vector<1x128xf32>
    %12 = arith.extf %10 : vector<128x128xbf16> to vector<128x128xf32>
    %13 = vector.broadcast %11 : vector<1x128xf32> to vector<128x128xf32>
    %14 = arith.mulf %12, %13 : vector<128x128xf32>
    %c0_9 = arith.constant 0 : index
    %c0_10 = arith.constant 0 : index
    %15 = vector.load %arg6[%c0_9, %c0_10] : memref<1x128xf32, #tpu.memory_space<vmem>>, vector<1x128xf32>
    %16 = vector.broadcast %15 : vector<1x128xf32> to vector<128x128xf32>
    %17 = arith.addf %14, %16 : vector<128x128xf32>
    %18 = arith.addf %9, %17 : vector<128x128xf32>
    %cst_11 = arith.constant 0.000000e+00 : f32
    %19 = vector.broadcast %cst_11 : f32 to vector<128x128xf32>
    %20 = arith.maximumf %18, %19 : vector<128x128xf32>
    %c0_12 = arith.constant 0 : index
    %c0_13 = arith.constant 0 : index
    %21 = vector.load %arg7[%c0_12, %c0_13] : memref<128x128xf32, #tpu.memory_space<vmem>>, vector<128x128xf32>
    tpu.vector_store %arg7[%c0_12, %c0_13], %20 {strides = array<i32>} : memref<128x128xf32, #tpu.memory_space<vmem>>, vector<128x128xf32>,
    return
  }
  func.func @transform_0(%arg0: i32) -> (i32, i32) {
    %c0_i32 = arith.constant 0 : i32
    %c0_i32_0 = arith.constant 0 : i32
    return %arg0, %c0_i32 : i32, i32
  }
  func.func @transform_1(%arg0: i32) -> (i32, i32) {
    %c0_i32 = arith.constant 0 : i32
    %c0_i32_0 = arith.constant 0 : i32
    return %arg0, %c0_i32 : i32, i32
  }
  func.func @transform_2(%arg0: i32) -> (i32, i32) {
    %c0_i32 = arith.constant 0 : i32
    %c0_i32_0 = arith.constant 0 : i32
    %c0_i32_1 = arith.constant 0 : i32
    return %c0_i32, %c0_i32_0 : i32, i32
  }
  func.func @transform_3(%arg0: i32) -> (i32, i32) {
    %c0_i32 = arith.constant 0 : i32
    %c0_i32_0 = arith.constant 0 : i32
    %c0_i32_1 = arith.constant 0 : i32
    return %c0_i32, %c0_i32_0 : i32, i32
  }
  func.func @transform_4(%arg0: i32) -> (i32, i32) {
    %c0_i32 = arith.constant 0 : i32
    %c0_i32_0 = arith.constant 0 : i32
    %c0_i32_1 = arith.constant 0 : i32
    return %c0_i32, %c0_i32_0 : i32, i32
  }
  func.func @transform_5(%arg0: i32) -> (i32, i32) {
    %c0_i32 = arith.constant 0 : i32
    %c0_i32_0 = arith.constant 0 : i32
    %c0_i32_1 = arith.constant 0 : i32
    return %c0_i32, %c0_i32_0 : i32, i32
  }
  func.func @transform_6(%arg0: i32) -> (i32, i32) {
    %c0_i32 = arith.constant 0 : i32
    %c0_i32_0 = arith.constant 0 : i32
    return %arg0, %c0_i32 : i32, i32
  }
}

</mosaic_0001>

<llo_original>
// kernel: basic_block_forward.5
$region0: #{basic_block_forward.5}
  #allocation0 [shape = 'u32[]', space=smem, size = 0x4, offset = 0x4, fixed_abs, tag = 'smem constant byte address 0x4 - core index']
  #allocation1 [shape = 'u32[144,128]{1,0:T(1,128)}', space=vmem, size = 0x12000, scoped, tag = 'internal scratch']
  %s0 = inlined_call_operand.vmem [shape: bf16[128,128], index: 0, kind: input, shape index: {}]
  %s1 = inlined_call_operand.vmem [shape: f32[1,128], index: 1, kind: input, shape index: {}]
  %s2 = inlined_call_operand.vmem [shape: f32[1,128], index: 2, kind: input, shape index: {}]
  %s3 = inlined_call_operand.vmem [shape: bf16[128,128], index: 3, kind: output, shape index: {}]
  %s4 = sld [smem:[#allocation0]]
  $region22: #{basic_block_forward.5} parent=0
    _
  %s6 = ssub.s32 1, %s4
  %s7 = scalar_select 0, %s6, %s4
  // Predicated region
  $region2: #{basic_block_forward.5} parent=0 // pred_check
    _
  $region3: #{basic_block_forward.5} parent=0 // pred_check_branch
    %9 = sbr.rel (0) target = $region5
  $region4: #{basic_block_forward.5} parent=0 // pred_region
    _
  $region5: #{basic_block_forward.5} parent=0 // pred_fallthru
    _
  // Predicated region
  $region6: #{basic_block_forward.5} parent=0 // pred_check
    _
  $region7: #{basic_block_forward.5} parent=0 // pred_check_branch
    %11 = sbr.rel (0) target = $region9
  $region8: #{basic_block_forward.5} parent=0 // pred_region
    _
  $region9: #{basic_block_forward.5} parent=0 // pred_fallthru
    _
  // Predicated region
  $region10: #{basic_block_forward.5} parent=0 // pred_check
    _
  $region11: #{basic_block_forward.5} parent=0 // pred_check_branch
    %13 = sbr.rel (0) target = $region13
  $region12: #{basic_block_forward.5} parent=0 // pred_region
    _
  $region13: #{basic_block_forward.5} parent=0 // pred_fallthru
    _
  %v14 = vld [vmem:[%s0] sm:$0xf]
  %v15 = vld [vmem:[%s0 + $0x4] sm:$0xf]
  %v16 = vld [vmem:[%s0 + $0x8] sm:$0xf]
  %v17 = vld [vmem:[%s0 + $0xc] sm:$0xf]
  %v18 = vld [vmem:[%s0 + $0x10] sm:$0xf]
  %v19 = vld [vmem:[%s0 + $0x14] sm:$0xf]
  %v20 = vld [vmem:[%s0 + $0x18] sm:$0xf]
  %v21 = vld [vmem:[%s0 + $0x1c] sm:$0xf]
  %v22 = vld [vmem:[%s0 + $0x20] sm:$0xf]
  %v23 = vld [vmem:[%s0 + $0x24] sm:$0xf]
  %v24 = vld [vmem:[%s0 + $0x28] sm:$0xf]
  %v25 = vld [vmem:[%s0 + $0x2c] sm:$0xf]
  %v26 = vld [vmem:[%s0 + $0x30] sm:$0xf]
  %v27 = vld [vmem:[%s0 + $0x34] sm:$0xf]
  %v28 = vld [vmem:[%s0 + $0x38] sm:$0xf]
  %v29 = vld [vmem:[%s0 + $0x3c] sm:$0xf]
  %v30 = vld [vmem:[%s1] sm:$0x1]
  %v31 = vunpack.c.l.bf16 %v14
  %v32 = vunpack.c.l.bf16 %v15
  %v33 = vunpack.c.l.bf16 %v16
  %v34 = vunpack.c.l.bf16 %v17
  %v35 = vunpack.c.l.bf16 %v18
  %v36 = vunpack.c.l.bf16 %v19
  %v37 = vunpack.c.l.bf16 %v20
  %v38 = vunpack.c.l.bf16 %v21
  %v39 = vunpack.c.l.bf16 %v22
  %v40 = vunpack.c.l.bf16 %v23
  %v41 = vunpack.c.l.bf16 %v24
  %v42 = vunpack.c.l.bf16 %v25
  %v43 = vunpack.c.l.bf16 %v26
  %v44 = vunpack.c.l.bf16 %v27
  %v45 = vunpack.c.l.bf16 %v28
  %v46 = vunpack.c.l.bf16 %v29
  %v48 = vlaneseq
  %v49 = vshrl.u32 %v48, 7
  %v50 = vsub.s32 0, %v49
  %v51 = vrot.slane %v30, %v50
  %v53 = vmul.f32 %v31, %v51
  %v54 = vmul.f32 %v32, %v51
  %v55 = vmul.f32 %v33, %v51
  %v56 = vmul.f32 %v34, %v51
  %v57 = vmul.f32 %v35, %v51
  %v58 = vmul.f32 %v36, %v51
  %v59 = vmul.f32 %v37, %v51
  %v60 = vmul.f32 %v38, %v51
  %v61 = vmul.f32 %v39, %v51
  %v62 = vmul.f32 %v40, %v51
  %v63 = vmul.f32 %v41, %v51
  %v64 = vmul.f32 %v42, %v51
  %v65 = vmul.f32 %v43, %v51
  %v66 = vmul.f32 %v44, %v51
  %v67 = vmul.f32 %v45, %v51
  %v68 = vmul.f32 %v46, %v51
  %v69 = vld [vmem:[%s2] sm:$0x1]
  %v71 = vlaneseq
  %v72 = vshrl.u32 %v71, 7
  %v73 = vsub.s32 0, %v72
  %v74 = vrot.slane %v69, %v73
  %v76 = vadd.f32 %v53, %v74
  %v77 = vadd.f32 %v54, %v74
  %v78 = vadd.f32 %v55, %v74
  %v79 = vadd.f32 %v56, %v74
  %v80 = vadd.f32 %v57, %v74
  %v81 = vadd.f32 %v58, %v74
  %v82 = vadd.f32 %v59, %v74
  %v83 = vadd.f32 %v60, %v74
  %v84 = vadd.f32 %v61, %v74
  %v85 = vadd.f32 %v62, %v74
  %v86 = vadd.f32 %v63, %v74
  %v87 = vadd.f32 %v64, %v74
  %v88 = vadd.f32 %v65, %v74
  %v89 = vadd.f32 %v66, %v74
  %v90 = vadd.f32 %v67, %v74
  %v91 = vadd.f32 %v68, %v74
  %v92 = vmax.f32 %v76, 0.0
  %v93 = vmax.f32 %v77, 0.0
  %v94 = vmax.f32 %v78, 0.0
  %v95 = vmax.f32 %v79, 0.0
  %v96 = vmax.f32 %v80, 0.0
  %v97 = vmax.f32 %v81, 0.0
  %v98 = vmax.f32 %v82, 0.0
  %v99 = vmax.f32 %v83, 0.0
  %v100 = vmax.f32 %v84, 0.0
  %v101 = vmax.f32 %v85, 0.0
  %v102 = vmax.f32 %v86, 0.0
  %v103 = vmax.f32 %v87, 0.0
  %v104 = vmax.f32 %v88, 0.0
  %v105 = vmax.f32 %v89, 0.0
  %v106 = vmax.f32 %v90, 0.0
  %v107 = vmax.f32 %v91, 0.0
  %v108 = vpack.c.bf16 %v93, %v92
  %v109 = vpack.c.bf16 %v95, %v94
  %v110 = vpack.c.bf16 %v97, %v96
  %v111 = vpack.c.bf16 %v99, %v98
  %v112 = vpack.c.bf16 %v101, %v100
  %v113 = vpack.c.bf16 %v103, %v102
  %v114 = vpack.c.bf16 %v105, %v104
  %v115 = vpack.c.bf16 %v107, %v106
  %v124 = vunpack.c.l.b16 %v108
  %v125 = vunpack.c.h.b16 %v108
  %v126 = vunpack.c.l.b16 %v109
  %v127 = vunpack.c.h.b16 %v109
  %v128 = vunpack.c.l.b16 %v110
  %v129 = vunpack.c.h.b16 %v110
  %v130 = vunpack.c.l.b16 %v111
  %v131 = vunpack.c.h.b16 %v111
  %v132 = vunpack.c.l.b16 %v112
  %v133 = vunpack.c.h.b16 %v112
  %v134 = vunpack.c.l.b16 %v113
  %v135 = vunpack.c.h.b16 %v113
  %v136 = vunpack.c.l.b16 %v114
  %v137 = vunpack.c.h.b16 %v114
  %v138 = vunpack.c.l.b16 %v115
  %v139 = vunpack.c.h.b16 %v115
  %v140 = vpack.c.b16 %v124, %v124
  %v141 = vpack.c.b16 %v125, %v125
  %v142 = vpack.c.b16 %v126, %v126
  %v143 = vpack.c.b16 %v127, %v127
  %v144 = vpack.c.b16 %v128, %v128
  %v145 = vpack.c.b16 %v129, %v129
  %v146 = vpack.c.b16 %v130, %v130
  %v147 = vpack.c.b16 %v131, %v131
  %v148 = vpack.c.b16 %v132, %v132
  %v149 = vpack.c.b16 %v133, %v133
  %v150 = vpack.c.b16 %v134, %v134
  %v151 = vpack.c.b16 %v135, %v135
  %v152 = vpack.c.b16 %v136, %v136
  %v153 = vpack.c.b16 %v137, %v137
  %v154 = vpack.c.b16 %v138, %v138
  %v155 = vpack.c.b16 %v139, %v139
  %172 = vst [vmem:[%s3] sm:$0xf] %v140
  %173 = vst [vmem:[%s3 + $0x4] sm:$0xf] %v141
  %174 = vst [vmem:[%s3 + $0x8] sm:$0xf] %v142
  %175 = vst [vmem:[%s3 + $0xc] sm:$0xf] %v143
  %176 = vst [vmem:[%s3 + $0x10] sm:$0xf] %v144
  %177 = vst [vmem:[%s3 + $0x14] sm:$0xf] %v145
  %178 = vst [vmem:[%s3 + $0x18] sm:$0xf] %v146
  %179 = vst [vmem:[%s3 + $0x1c] sm:$0xf] %v147
  %180 = vst [vmem:[%s3 + $0x20] sm:$0xf] %v148
  %181 = vst [vmem:[%s3 + $0x24] sm:$0xf] %v149
  %182 = vst [vmem:[%s3 + $0x28] sm:$0xf] %v150
  %183 = vst [vmem:[%s3 + $0x2c] sm:$0xf] %v151
  %184 = vst [vmem:[%s3 + $0x30] sm:$0xf] %v152
  %185 = vst [vmem:[%s3 + $0x34] sm:$0xf] %v153
  %186 = vst [vmem:[%s3 + $0x38] sm:$0xf] %v154
  %187 = vst [vmem:[%s3 + $0x3c] sm:$0xf] %v155
  // Predicated region
  $region14: #{basic_block_forward.5} parent=0 // pred_check
    _
  $region15: #{basic_block_forward.5} parent=0 // pred_check_branch
    %189 = sbr.rel (0) target = $region17
  $region16: #{basic_block_forward.5} parent=0 // pred_region
    _
  $region17: #{basic_block_forward.5} parent=0 // pred_fallthru
    _
  // Predicated region
  $region18: #{basic_block_forward.5} parent=0 // pred_check
    _
  $region19: #{basic_block_forward.5} parent=0 // pred_check_branch
    %191 = sbr.rel (0) target = $region21
  $region20: #{basic_block_forward.5} parent=0 // pred_region
    _
  $region21: #{basic_block_forward.5} parent=0 // pred_fallthru
    _

// kernel: basic_block_forward.4
$region0: #{basic_block_forward.4}
  #allocation0 [shape = 'u32[]', space=smem, size = 0x4, offset = 0x4, fixed_abs, tag = 'smem constant byte address 0x4 - core index']
  #allocation1 [shape = 'u32[144,128]{1,0:T(1,128)}', space=vmem, size = 0x12000, scoped, tag = 'internal scratch']
  #allocation2 [shape = 'f32[128,128]{1,0:T(8,128)}', space=vmem, size = 0x10000, scoped, tag = 'scratch operand']
  %s0 = inlined_call_operand.vmem [shape: bf16[128,128], index: 0, kind: input, shape index: {}]
  %s1 = inlined_call_operand.vmem [shape: bf16[128,128], index: 1, kind: input, shape index: {}]
  %s2 = inlined_call_operand.vmem [shape: bf16[128,128], index: 2, kind: input, shape index: {}]
  %s3 = inlined_call_operand.vmem [shape: bf16[128,128], index: 3, kind: input, shape index: {}]
  %s4 = inlined_call_operand.vmem [shape: bf16[128,128], index: 4, kind: output, shape index: {0}]
  %s5 = inlined_call_operand.vmem [shape: bf16[128,128], index: 5, kind: output, shape index: {1}]
  %s6 = inlined_call_operand.vmem [shape: f32[8,128], index: 6, kind: output, shape index: {2}]
  %s7 = inlined_call_operand.vmem [shape: f32[8,128], index: 7, kind: output, shape index: {3}]
  %8 = xla_tuple %s4, %s5, %s6, %s7
  %s9 = sld [smem:[#allocation0]]
  $region58: #{basic_block_forward.4} parent=0
    _
  %s11 = ssub.s32 1, %s9
  %s12 = scalar_select 0, %s11, %s9
  // Predicated region
  $region2: #{basic_block_forward.4} parent=0 // pred_check
    _
  $region3: #{basic_block_forward.4} parent=0 // pred_check_branch
    %14 = sbr.rel (0) target = $region5
  $region4: #{basic_block_forward.4} parent=0 // pred_region
    _
  $region5: #{basic_block_forward.4} parent=0 // pred_fallthru
    _
  // Predicated region
  $region6: #{basic_block_forward.4} parent=0 // pred_check
    _
  $region7: #{basic_block_forward.4} parent=0 // pred_check_branch
    %16 = sbr.rel (0) target = $region9
  $region8: #{basic_block_forward.4} parent=0 // pred_region
    _
  $region9: #{basic_block_forward.4} parent=0 // pred_fallthru
    _
  // Predicated region
  $region10: #{basic_block_forward.4} parent=0 // pred_check
    _
  $region11: #{basic_block_forward.4} parent=0 // pred_check_branch
    %18 = sbr.rel (0) target = $region13
  $region12: #{basic_block_forward.4} parent=0 // pred_region
    _
  $region13: #{basic_block_forward.4} parent=0 // pred_fallthru
    _
  // Predicated region
  $region14: #{basic_block_forward.4} parent=0 // pred_check
    _
  $region15: #{basic_block_forward.4} parent=0 // pred_check_branch
    %20 = sbr.rel (0) target = $region17
  $region16: #{basic_block_forward.4} parent=0 // pred_region
    _
  $region17: #{basic_block_forward.4} parent=0 // pred_fallthru
    _
  %p22 = scmp.eq.s32.totalorder 0, 0
  // Predicated region
  $region18: #{basic_block_forward.4} parent=0 // pred_check
    %p23 = pneg %p22
  $region19: #{basic_block_forward.4} parent=0 // pred_check_branch
    %25 = sbr.rel (%p23) target = $region21
  $region20: #{basic_block_forward.4} parent=0 // pred_region
    %26 = vst [vmem:[#allocation2] sm:$0xff] 0.0
    %27 = vst [vmem:[#allocation2 + $0x8] sm:$0xff] 0.0
    %28 = vst [vmem:[#allocation2 + $0x10] sm:$0xff] 0.0
    %29 = vst [vmem:[#allocation2 + $0x18] sm:$0xff] 0.0
    %30 = vst [vmem:[#allocation2 + $0x20] sm:$0xff] 0.0
    %31 = vst [vmem:[#allocation2 + $0x28] sm:$0xff] 0.0
    %32 = vst [vmem:[#allocation2 + $0x30] sm:$0xff] 0.0
    %33 = vst [vmem:[#allocation2 + $0x38] sm:$0xff] 0.0
    %34 = vst [vmem:[#allocation2 + $0x40] sm:$0xff] 0.0
    %35 = vst [vmem:[#allocation2 + $0x48] sm:$0xff] 0.0
    %36 = vst [vmem:[#allocation2 + $0x50] sm:$0xff] 0.0
    %37 = vst [vmem:[#allocation2 + $0x58] sm:$0xff] 0.0
    %38 = vst [vmem:[#allocation2 + $0x60] sm:$0xff] 0.0
    %39 = vst [vmem:[#allocation2 + $0x68] sm:$0xff] 0.0
    %40 = vst [vmem:[#allocation2 + $0x70] sm:$0xff] 0.0
    %41 = vst [vmem:[#allocation2 + $0x78] sm:$0xff] 0.0
  $region21: #{basic_block_forward.4} parent=0 // pred_fallthru
    _
  %s42 = smul.u32 0, 128
  %v43 = vld [vmem:[#allocation2] sm:$0xff]
  %v44 = vld [vmem:[#allocation2 + $0x8] sm:$0xff]
  %v45 = vld [vmem:[#allocation2 + $0x10] sm:$0xff]
  %v46 = vld [vmem:[#allocation2 + $0x18] sm:$0xff]
  %v47 = vld [vmem:[#allocation2 + $0x20] sm:$0xff]
  %v48 = vld [vmem:[#allocation2 + $0x28] sm:$0xff]
  %v49 = vld [vmem:[#allocation2 + $0x30] sm:$0xff]
  %v50 = vld [vmem:[#allocation2 + $0x38] sm:$0xff]
  %v51 = vld [vmem:[#allocation2 + $0x40] sm:$0xff]
  %v52 = vld [vmem:[#allocation2 + $0x48] sm:$0xff]
  %v53 = vld [vmem:[#allocation2 + $0x50] sm:$0xff]
  %v54 = vld [vmem:[#allocation2 + $0x58] sm:$0xff]
  %v55 = vld [vmem:[#allocation2 + $0x60] sm:$0xff]
  %v56 = vld [vmem:[#allocation2 + $0x68] sm:$0xff]
  %v57 = vld [vmem:[#allocation2 + $0x70] sm:$0xff]
  %v58 = vld [vmem:[#allocation2 + $0x78] sm:$0xff]
  %v59 = vld [vmem:[%s0] sm:$0xf]
  %v60 = vld [vmem:[%s0 + $0x4] sm:$0xf]
  %v61 = vld [vmem:[%s0 + $0x8] sm:$0xf]
  %v62 = vld [vmem:[%s0 + $0xc] sm:$0xf]
  %v63 = vld [vmem:[%s0 + $0x10] sm:$0xf]
  %v64 = vld [vmem:[%s0 + $0x14] sm:$0xf]
  %v65 = vld [vmem:[%s0 + $0x18] sm:$0xf]
  %v66 = vld [vmem:[%s0 + $0x1c] sm:$0xf]
  %v67 = vld [vmem:[%s0 + $0x20] sm:$0xf]
  %v68 = vld [vmem:[%s0 + $0x24] sm:$0xf]
  %v69 = vld [vmem:[%s0 + $0x28] sm:$0xf]
  %v70 = vld [vmem:[%s0 + $0x2c] sm:$0xf]
  %v71 = vld [vmem:[%s0 + $0x30] sm:$0xf]
  %v72 = vld [vmem:[%s0 + $0x34] sm:$0xf]
  %v73 = vld [vmem:[%s0 + $0x38] sm:$0xf]
  %v74 = vld [vmem:[%s0 + $0x3c] sm:$0xf]
  %s75 = sshra.s32 %s42, 3
  %s76 = sand.u32 %s42, 7
  %s77 = smul.addr %s75, 4
  %s78 = scalar_lea.vmem %s1, %s77
  %v79 = vld [vmem:[%s78] sm:$0xf]
  %v80 = vld [vmem:[%s78 + $0x4] sm:$0xf]
  %v81 = vld [vmem:[%s78 + $0x8] sm:$0xf]
  %v82 = vld [vmem:[%s78 + $0xc] sm:$0xf]
  %v83 = vld [vmem:[%s78 + $0x10] sm:$0xf]
  %v84 = vld [vmem:[%s78 + $0x14] sm:$0xf]
  %v85 = vld [vmem:[%s78 + $0x18] sm:$0xf]
  %v86 = vld [vmem:[%s78 + $0x1c] sm:$0xf]
  %v87 = vld [vmem:[%s78 + $0x20] sm:$0xf]
  %v88 = vld [vmem:[%s78 + $0x24] sm:$0xf]
  %v89 = vld [vmem:[%s78 + $0x28] sm:$0xf]
  %v90 = vld [vmem:[%s78 + $0x2c] sm:$0xf]
  %v91 = vld [vmem:[%s78 + $0x30] sm:$0xf]
  %v92 = vld [vmem:[%s78 + $0x34] sm:$0xf]
  %v93 = vld [vmem:[%s78 + $0x38] sm:$0xf]
  %v94 = vld [vmem:[%s78 + $0x3c] sm:$0xf]
  %v111 = vunpack.c.l.b16 %v59
  %v112 = vunpack.c.l.b16 %v60
  %v113 = vunpack.c.l.b16 %v61
  %v114 = vunpack.c.l.b16 %v62
  %v115 = vunpack.c.l.b16 %v63
  %v116 = vunpack.c.l.b16 %v64
  %v117 = vunpack.c.l.b16 %v65
  %v118 = vunpack.c.l.b16 %v66
  %v119 = vunpack.c.l.b16 %v67
  %v120 = vunpack.c.l.b16 %v68
  %v121 = vunpack.c.l.b16 %v69
  %v122 = vunpack.c.l.b16 %v70
  %v123 = vunpack.c.l.b16 %v71
  %v124 = vunpack.c.l.b16 %v72
  %v125 = vunpack.c.l.b16 %v73
  %v126 = vunpack.c.l.b16 %v74
  %v127 = vpack.c.b16 %v112, %v111
  %v128 = vpack.c.b16 %v114, %v113
  %v129 = vpack.c.b16 %v116, %v115
  %v130 = vpack.c.b16 %v118, %v117
  %v131 = vpack.c.b16 %v120, %v119
  %v132 = vpack.c.b16 %v122, %v121
  %v133 = vpack.c.b16 %v124, %v123
  %v134 = vpack.c.b16 %v126, %v125
  %v159 = vunpack.c.l.b16 %v79
  %v160 = vunpack.c.l.b16 %v80
  %v161 = vunpack.c.l.b16 %v81
  %v162 = vunpack.c.l.b16 %v82
  %v163 = vunpack.c.l.b16 %v83
  %v164 = vunpack.c.l.b16 %v84
  %v165 = vunpack.c.l.b16 %v85
  %v166 = vunpack.c.l.b16 %v86
  %v167 = vunpack.c.l.b16 %v87
  %v168 = vunpack.c.l.b16 %v88
  %v169 = vunpack.c.l.b16 %v89
  %v170 = vunpack.c.l.b16 %v90
  %v171 = vunpack.c.l.b16 %v91
  %v172 = vunpack.c.l.b16 %v92
  %v173 = vunpack.c.l.b16 %v93
  %v174 = vunpack.c.l.b16 %v94
  %v175 = vpack.c.b16 %v160, %v159
  %v176 = vpack.c.b16 %v162, %v161
  %v177 = vpack.c.b16 %v164, %v163
  %v178 = vpack.c.b16 %v166, %v165
  %v179 = vpack.c.b16 %v168, %v167
  %v180 = vpack.c.b16 %v170, %v169
  %v181 = vpack.c.b16 %v172, %v171
  %v182 = vpack.c.b16 %v174, %v173
  %191 = vmatprep.subr.bf16.mxu0 0
  %192 = vmatpush1.bf16.msra.mxu0 %v175
  %193 = vmatprep.subr.bf16.mxu0 0
  %194 = vmatpush1.bf16.msra.mxu0 %v176
  %195 = vmatprep.subr.bf16.mxu0 0
  %196 = vmatpush1.bf16.msra.mxu0 %v177
  %197 = vmatprep.subr.bf16.mxu0 0
  %198 = vmatpush1.bf16.msra.mxu0 %v178
  %199 = vmatprep.subr.bf16.mxu0 0
  %200 = vmatpush1.bf16.msra.mxu0 %v179
  %201 = vmatprep.subr.bf16.mxu0 0
  %202 = vmatpush1.bf16.msra.mxu0 %v180
  %203 = vmatprep.subr.bf16.mxu0 0
  %204 = vmatpush1.bf16.msra.mxu0 %v181
  %205 = vmatprep.subr.bf16.mxu0 0
  %206 = vmatpush1.bf16.msra.mxu0 %v182
  %207 = vmatprep.subr.bf16.mxu0 0
  %208 = vmatpush1.bf16.msra.mxu0 0
  %209 = vmatprep.subr.bf16.mxu0 0
  %210 = vmatpush1.bf16.msra.mxu0 0
  %211 = vmatprep.subr.bf16.mxu0 0
  %212 = vmatpush1.bf16.msra.mxu0 0
  %213 = vmatprep.subr.bf16.mxu0 0
  %214 = vmatpush1.bf16.msra.mxu0 0
  %215 = vmatprep.subr.bf16.mxu0 0
  %216 = vmatpush1.bf16.msra.mxu0 0
  %217 = vmatprep.subr.bf16.mxu0 0
  %218 = vmatpush1.bf16.msra.mxu0 0
  %219 = vmatprep.subr.bf16.mxu0 0
  %220 = vmatpush1.bf16.msra.mxu0 0
  %221 = vmatprep.subr.bf16.mxu0 0
  %222 = vmatpush1.bf16.msra.mxu0 0
  %223 = vmatprep.mubr.bf16.mxu0 0
  %224 = vmatmul.mubr.bf16.gmra.mrb[0].mxu0 %v127
  %v225 = vpop.f32.mrb[0].mxu0
  %v226 = vadd.f32 0.0, %v225
  %v227 = vpop.f32.mrb[0].mxu0
  %v228 = vpop.f32.mrb[0].mxu0
  %v229 = vadd.f32 0.0, %v228
  %v230 = vpop.f32.mrb[0].mxu0
  %231 = vmatprep.mubr.bf16.mxu0 0
  %232 = vmatmul.mubr.bf16.gmra.mrb[0].mxu0 %v128
  %v233 = vpop.f32.mrb[0].mxu0
  %v234 = vadd.f32 0.0, %v233
  %v235 = vpop.f32.mrb[0].mxu0
  %v236 = vpop.f32.mrb[0].mxu0
  %v237 = vadd.f32 0.0, %v236
  %v238 = vpop.f32.mrb[0].mxu0
  %239 = vmatprep.mubr.bf16.mxu0 0
  %240 = vmatmul.mubr.bf16.gmra.mrb[0].mxu0 %v129
  %v241 = vpop.f32.mrb[0].mxu0
  %v242 = vadd.f32 0.0, %v241
  %v243 = vpop.f32.mrb[0].mxu0
  %v244 = vpop.f32.mrb[0].mxu0
  %v245 = vadd.f32 0.0, %v244
  %v246 = vpop.f32.mrb[0].mxu0
  %247 = vmatprep.mubr.bf16.mxu0 0
  %248 = vmatmul.mubr.bf16.gmra.mrb[0].mxu0 %v130
  %v249 = vpop.f32.mrb[0].mxu0
  %v250 = vadd.f32 0.0, %v249
  %v251 = vpop.f32.mrb[0].mxu0
  %v252 = vpop.f32.mrb[0].mxu0
  %v253 = vadd.f32 0.0, %v252
  %v254 = vpop.f32.mrb[0].mxu0
  %255 = vmatprep.mubr.bf16.mxu0 0
  %256 = vmatmul.mubr.bf16.gmra.mrb[0].mxu0 %v131
  %v257 = vpop.f32.mrb[0].mxu0
  %v258 = vadd.f32 0.0, %v257
  %v259 = vpop.f32.mrb[0].mxu0
  %v260 = vpop.f32.mrb[0].mxu0
  %v261 = vadd.f32 0.0, %v260
  %v262 = vpop.f32.mrb[0].mxu0
  %263 = vmatprep.mubr.bf16.mxu0 0
  %264 = vmatmul.mubr.bf16.gmra.mrb[0].mxu0 %v132
  %v265 = vpop.f32.mrb[0].mxu0
  %v266 = vadd.f32 0.0, %v265
  %v267 = vpop.f32.mrb[0].mxu0
  %v268 = vpop.f32.mrb[0].mxu0
  %v269 = vadd.f32 0.0, %v268
  %v270 = vpop.f32.mrb[0].mxu0
  %271 = vmatprep.mubr.bf16.mxu0 0
  %272 = vmatmul.mubr.bf16.gmra.mrb[0].mxu0 %v133
  %v273 = vpop.f32.mrb[0].mxu0
  %v274 = vadd.f32 0.0, %v273
  %v275 = vpop.f32.mrb[0].mxu0
  %v276 = vpop.f32.mrb[0].mxu0
  %v277 = vadd.f32 0.0, %v276
  %v278 = vpop.f32.mrb[0].mxu0
  %279 = vmatprep.mubr.bf16.mxu0 0
  %280 = vmatmul.mubr.bf16.gmra.mrb[0].mxu0 %v134
  %v281 = vpop.f32.mrb[0].mxu0
  %v282 = vadd.f32 0.0, %v281
  %v283 = vpop.f32.mrb[0].mxu0
  %v284 = vpop.f32.mrb[0].mxu0
  %v285 = vadd.f32 0.0, %v284
  %v286 = vpop.f32.mrb[0].mxu0
  %287 = vdwg.mxu0
  %v288 = vadd.f32 %v43, %v226
  %v289 = vadd.f32 %v44, %v229
  %v290 = vadd.f32 %v45, %v234
  %v291 = vadd.f32 %v46, %v237
  %v292 = vadd.f32 %v47, %v242
  %v293 = vadd.f32 %v48, %v245
  %v294 = vadd.f32 %v49, %v250
  %v295 = vadd.f32 %v50, %v253
  %v296 = vadd.f32 %v51, %v258
  %v297 = vadd.f32 %v52, %v261
  %v298 = vadd.f32 %v53, %v266
  %v299 = vadd.f32 %v54, %v269
  %v300 = vadd.f32 %v55, %v274
  %v301 = vadd.f32 %v56, %v277
  %v302 = vadd.f32 %v57, %v282
  %v303 = vadd.f32 %v58, %v285
  %304 = vst [vmem:[#allocation2] sm:$0xff] %v288
  %305 = vst [vmem:[#allocation2 + $0x8] sm:$0xff] %v289
  %306 = vst [vmem:[#allocation2 + $0x10] sm:$0xff] %v290
  %307 = vst [vmem:[#allocation2 + $0x18] sm:$0xff] %v291
  %308 = vst [vmem:[#allocation2 + $0x20] sm:$0xff] %v292
  %309 = vst [vmem:[#allocation2 + $0x28] sm:$0xff] %v293
  %310 = vst [vmem:[#allocation2 + $0x30] sm:$0xff] %v294
  %311 = vst [vmem:[#allocation2 + $0x38] sm:$0xff] %v295
  %312 = vst [vmem:[#allocation2 + $0x40] sm:$0xff] %v296
  %313 = vst [vmem:[#allocation2 + $0x48] sm:$0xff] %v297
  %314 = vst [vmem:[#allocation2 + $0x50] sm:$0xff] %v298
  %315 = vst [vmem:[#allocation2 + $0x58] sm:$0xff] %v299
  %316 = vst [vmem:[#allocation2 + $0x60] sm:$0xff] %v300
  %317 = vst [vmem:[#allocation2 + $0x68] sm:$0xff] %v301
  %318 = vst [vmem:[#allocation2 + $0x70] sm:$0xff] %v302
  %319 = vst [vmem:[#allocation2 + $0x78] sm:$0xff] %v303
  // Predicated region
  $region22: #{basic_block_forward.4} parent=0 // pred_check
    %p320 = pneg %p22
  $region23: #{basic_block_forward.4} parent=0 // pred_check_branch
    %322 = sbr.rel (%p320) target = $region25
  $region24: #{basic_block_forward.4} parent=0 // pred_region
    %v323 = vld [vmem:[#allocation2] sm:$0xff]
    %v324 = vld [vmem:[#allocation2 + $0x8] sm:$0xff]
    %v325 = vld [vmem:[#allocation2 + $0x10] sm:$0xff]
    %v326 = vld [vmem:[#allocation2 + $0x18] sm:$0xff]
    %v327 = vld [vmem:[#allocation2 + $0x20] sm:$0xff]
    %v328 = vld [vmem:[#allocation2 + $0x28] sm:$0xff]
    %v329 = vld [vmem:[#allocation2 + $0x30] sm:$0xff]
    %v330 = vld [vmem:[#allocation2 + $0x38] sm:$0xff]
    %v331 = vld [vmem:[#allocation2 + $0x40] sm:$0xff]
    %v332 = vld [vmem:[#allocation2 + $0x48] sm:$0xff]
    %v333 = vld [vmem:[#allocation2 + $0x50] sm:$0xff]
    %v334 = vld [vmem:[#allocation2 + $0x58] sm:$0xff]
    %v335 = vld [vmem:[#allocation2 + $0x60] sm:$0xff]
    %v336 = vld [vmem:[#allocation2 + $0x68] sm:$0xff]
    %v337 = vld [vmem:[#allocation2 + $0x70] sm:$0xff]
    %v338 = vld [vmem:[#allocation2 + $0x78] sm:$0xff]
    %v339 = vpack.c.bf16 %v324, %v323
    %v340 = vpack.c.bf16 %v326, %v325
    %v341 = vpack.c.bf16 %v328, %v327
    %v342 = vpack.c.bf16 %v330, %v329
    %v343 = vpack.c.bf16 %v332, %v331
    %v344 = vpack.c.bf16 %v334, %v333
    %v345 = vpack.c.bf16 %v336, %v335
    %v346 = vpack.c.bf16 %v338, %v337
    %v355 = vunpack.c.l.b16 %v339
    %v356 = vunpack.c.h.b16 %v339
    %v357 = vunpack.c.l.b16 %v340
    %v358 = vunpack.c.h.b16 %v340
    %v359 = vunpack.c.l.b16 %v341
    %v360 = vunpack.c.h.b16 %v341
    %v361 = vunpack.c.l.b16 %v342
    %v362 = vunpack.c.h.b16 %v342
    %v363 = vunpack.c.l.b16 %v343
    %v364 = vunpack.c.h.b16 %v343
    %v365 = vunpack.c.l.b16 %v344
    %v366 = vunpack.c.h.b16 %v344
    %v367 = vunpack.c.l.b16 %v345
    %v368 = vunpack.c.h.b16 %v345
    %v369 = vunpack.c.l.b16 %v346
    %v370 = vunpack.c.h.b16 %v346
    %v371 = vpack.c.b16 %v355, %v355
    %v372 = vpack.c.b16 %v356, %v356
    %v373 = vpack.c.b16 %v357, %v357
    %v374 = vpack.c.b16 %v358, %v358
    %v375 = vpack.c.b16 %v359, %v359
    %v376 = vpack.c.b16 %v360, %v360
    %v377 = vpack.c.b16 %v361, %v361
    %v378 = vpack.c.b16 %v362, %v362
    %v379 = vpack.c.b16 %v363, %v363
    %v380 = vpack.c.b16 %v364, %v364
    %v381 = vpack.c.b16 %v365, %v365
    %v382 = vpack.c.b16 %v366, %v366
    %v383 = vpack.c.b16 %v367, %v367
    %v384 = vpack.c.b16 %v368, %v368
    %v385 = vpack.c.b16 %v369, %v369
    %v386 = vpack.c.b16 %v370, %v370
    %403 = vst [vmem:[%s4] sm:$0xf] %v371
    %404 = vst [vmem:[%s4 + $0x4] sm:$0xf] %v372
    %405 = vst [vmem:[%s4 + $0x8] sm:$0xf] %v373
    %406 = vst [vmem:[%s4 + $0xc] sm:$0xf] %v374
    %407 = vst [vmem:[%s4 + $0x10] sm:$0xf] %v375
    %408 = vst [vmem:[%s4 + $0x14] sm:$0xf] %v376
    %409 = vst [vmem:[%s4 + $0x18] sm:$0xf] %v377
    %410 = vst [vmem:[%s4 + $0x1c] sm:$0xf] %v378
    %411 = vst [vmem:[%s4 + $0x20] sm:$0xf] %v379
    %412 = vst [vmem:[%s4 + $0x24] sm:$0xf] %v380
    %413 = vst [vmem:[%s4 + $0x28] sm:$0xf] %v381
    %414 = vst [vmem:[%s4 + $0x2c] sm:$0xf] %v382
    %415 = vst [vmem:[%s4 + $0x30] sm:$0xf] %v383
    %416 = vst [vmem:[%s4 + $0x34] sm:$0xf] %v384
    %417 = vst [vmem:[%s4 + $0x38] sm:$0xf] %v385
    %418 = vst [vmem:[%s4 + $0x3c] sm:$0xf] %v386
    %v419 = vadd.f32 %v323, %v324
    %v420 = vadd.f32 %v419, %v325
    %v421 = vadd.f32 %v420, %v326
    %v422 = vadd.f32 %v421, %v327
    %v423 = vadd.f32 %v422, %v328
    %v424 = vadd.f32 %v423, %v329
    %v425 = vadd.f32 %v424, %v330
    %v426 = vadd.f32 %v425, %v331
    %v427 = vadd.f32 %v426, %v332
    %v428 = vadd.f32 %v427, %v333
    %v429 = vadd.f32 %v428, %v334
    %v430 = vadd.f32 %v429, %v335
    %v431 = vadd.f32 %v430, %v336
    %v432 = vadd.f32 %v431, %v337
    %v433 = vadd.f32 %v432, %v338
    %v434 = vrot.slane %v433, 4
    %v435 = vadd.f32 %v433, %v434
    %v436 = vrot.slane %v435, 2
    %v437 = vadd.f32 %v435, %v436
    %v438 = vrot.slane %v437, 1
    %v439 = vadd.f32 %v437, %v438
    %440 = vst [vmem:[%s6] sm:$0x1] %v439
    %v441 = vmul.f32 %v323, %v323
    %v442 = vmul.f32 %v324, %v324
    %v443 = vmul.f32 %v325, %v325
    %v444 = vmul.f32 %v326, %v326
    %v445 = vmul.f32 %v327, %v327
    %v446 = vmul.f32 %v328, %v328
    %v447 = vmul.f32 %v329, %v329
    %v448 = vmul.f32 %v330, %v330
    %v449 = vmul.f32 %v331, %v331
    %v450 = vmul.f32 %v332, %v332
    %v451 = vmul.f32 %v333, %v333
    %v452 = vmul.f32 %v334, %v334
    %v453 = vmul.f32 %v335, %v335
    %v454 = vmul.f32 %v336, %v336
    %v455 = vmul.f32 %v337, %v337
    %v456 = vmul.f32 %v338, %v338
    %v457 = vadd.f32 %v441, %v442
    %v458 = vadd.f32 %v457, %v443
    %v459 = vadd.f32 %v458, %v444
    %v460 = vadd.f32 %v459, %v445
    %v461 = vadd.f32 %v460, %v446
    %v462 = vadd.f32 %v461, %v447
    %v463 = vadd.f32 %v462, %v448
    %v464 = vadd.f32 %v463, %v449
    %v465 = vadd.f32 %v464, %v450
    %v466 = vadd.f32 %v465, %v451
    %v467 = vadd.f32 %v466, %v452
    %v468 = vadd.f32 %v467, %v453
    %v469 = vadd.f32 %v468, %v454
    %v470 = vadd.f32 %v469, %v455
    %v471 = vadd.f32 %v470, %v456
    %v472 = vrot.slane %v471, 4
    %v473 = vadd.f32 %v471, %v472
    %v474 = vrot.slane %v473, 2
    %v475 = vadd.f32 %v473, %v474
    %v476 = vrot.slane %v475, 1
    %v477 = vadd.f32 %v475, %v476
    %478 = vst [vmem:[%s6 + $0x1] sm:$0x1] %v477
    %v479 = vld [vmem:[%s2] sm:$0xf]
    %v480 = vld [vmem:[%s2 + $0x4] sm:$0xf]
    %v481 = vld [vmem:[%s2 + $0x8] sm:$0xf]
    %v482 = vld [vmem:[%s2 + $0xc] sm:$0xf]
    %v483 = vld [vmem:[%s2 + $0x10] sm:$0xf]
    %v484 = vld [vmem:[%s2 + $0x14] sm:$0xf]
    %v485 = vld [vmem:[%s2 + $0x18] sm:$0xf]
    %v486 = vld [vmem:[%s2 + $0x1c] sm:$0xf]
    %v487 = vld [vmem:[%s2 + $0x20] sm:$0xf]
    %v488 = vld [vmem:[%s2 + $0x24] sm:$0xf]
    %v489 = vld [vmem:[%s2 + $0x28] sm:$0xf]
    %v490 = vld [vmem:[%s2 + $0x2c] sm:$0xf]
    %v491 = vld [vmem:[%s2 + $0x30] sm:$0xf]
    %v492 = vld [vmem:[%s2 + $0x34] sm:$0xf]
    %v493 = vld [vmem:[%s2 + $0x38] sm:$0xf]
    %v494 = vld [vmem:[%s2 + $0x3c] sm:$0xf]
    %v495 = vld [vmem:[%s3] sm:$0xf]
    %v496 = vld [vmem:[%s3 + $0x4] sm:$0xf]
    %v497 = vld [vmem:[%s3 + $0x8] sm:$0xf]
    %v498 = vld [vmem:[%s3 + $0xc] sm:$0xf]
    %v499 = vld [vmem:[%s3 + $0x10] sm:$0xf]
    %v500 = vld [vmem:[%s3 + $0x14] sm:$0xf]
    %v501 = vld [vmem:[%s3 + $0x18] sm:$0xf]
    %v502 = vld [vmem:[%s3 + $0x1c] sm:$0xf]
    %v503 = vld [vmem:[%s3 + $0x20] sm:$0xf]
    %v504 = vld [vmem:[%s3 + $0x24] sm:$0xf]
    %v505 = vld [vmem:[%s3 + $0x28] sm:$0xf]
    %v506 = vld [vmem:[%s3 + $0x2c] sm:$0xf]
    %v507 = vld [vmem:[%s3 + $0x30] sm:$0xf]
    %v508 = vld [vmem:[%s3 + $0x34] sm:$0xf]
    %v509 = vld [vmem:[%s3 + $0x38] sm:$0xf]
    %v510 = vld [vmem:[%s3 + $0x3c] sm:$0xf]
    %v527 = vunpack.c.l.b16 %v479
    %v528 = vunpack.c.l.b16 %v480
    %v529 = vunpack.c.l.b16 %v481
    %v530 = vunpack.c.l.b16 %v482
    %v531 = vunpack.c.l.b16 %v483
    %v532 = vunpack.c.l.b16 %v484
    %v533 = vunpack.c.l.b16 %v485
    %v534 = vunpack.c.l.b16 %v486
    %v535 = vunpack.c.l.b16 %v487
    %v536 = vunpack.c.l.b16 %v488
    %v537 = vunpack.c.l.b16 %v489
    %v538 = vunpack.c.l.b16 %v490
    %v539 = vunpack.c.l.b16 %v491
    %v540 = vunpack.c.l.b16 %v492
    %v541 = vunpack.c.l.b16 %v493
    %v542 = vunpack.c.l.b16 %v494
    %v543 = vpack.c.b16 %v528, %v527
    %v544 = vpack.c.b16 %v530, %v529
    %v545 = vpack.c.b16 %v532, %v531
    %v546 = vpack.c.b16 %v534, %v533
    %v547 = vpack.c.b16 %v536, %v535
    %v548 = vpack.c.b16 %v538, %v537
    %v549 = vpack.c.b16 %v540, %v539
    %v550 = vpack.c.b16 %v542, %v541
    %v575 = vunpack.c.l.b16 %v495
    %v576 = vunpack.c.l.b16 %v496
    %v577 = vunpack.c.l.b16 %v497
    %v578 = vunpack.c.l.b16 %v498
    %v579 = vunpack.c.l.b16 %v499
    %v580 = vunpack.c.l.b16 %v500
    %v581 = vunpack.c.l.b16 %v501
    %v582 = vunpack.c.l.b16 %v502
    %v583 = vunpack.c.l.b16 %v503
    %v584 = vunpack.c.l.b16 %v504
    %v585 = vunpack.c.l.b16 %v505
    %v586 = vunpack.c.l.b16 %v506
    %v587 = vunpack.c.l.b16 %v507
    %v588 = vunpack.c.l.b16 %v508
    %v589 = vunpack.c.l.b16 %v509
    %v590 = vunpack.c.l.b16 %v510
    %v591 = vpack.c.b16 %v576, %v575
    %v592 = vpack.c.b16 %v578, %v577
    %v593 = vpack.c.b16 %v580, %v579
    %v594 = vpack.c.b16 %v582, %v581
    %v595 = vpack.c.b16 %v584, %v583
    %v596 = vpack.c.b16 %v586, %v585
    %v597 = vpack.c.b16 %v588, %v587
    %v598 = vpack.c.b16 %v590, %v589
    %607 = vmatprep.subr.bf16.mxu0 0
    %608 = vmatpush1.bf16.msra.mxu0 %v591
    %609 = vmatprep.subr.bf16.mxu0 0
    %610 = vmatpush1.bf16.msra.mxu0 %v592
    %611 = vmatprep.subr.bf16.mxu0 0
    %612 = vmatpush1.bf16.msra.mxu0 %v593
    %613 = vmatprep.subr.bf16.mxu0 0
    %614 = vmatpush1.bf16.msra.mxu0 %v594
    %615 = vmatprep.subr.bf16.mxu0 0
    %616 = vmatpush1.bf16.msra.mxu0 %v595
    %617 = vmatprep.subr.bf16.mxu0 0
    %618 = vmatpush1.bf16.msra.mxu0 %v596
    %619 = vmatprep.subr.bf16.mxu0 0
    %620 = vmatpush1.bf16.msra.mxu0 %v597
    %621 = vmatprep.subr.bf16.mxu0 0
    %622 = vmatpush1.bf16.msra.mxu0 %v598
    %623 = vmatprep.subr.bf16.mxu0 0
    %624 = vmatpush1.bf16.msra.mxu0 0
    %625 = vmatprep.subr.bf16.mxu0 0
    %626 = vmatpush1.bf16.msra.mxu0 0
    %627 = vmatprep.subr.bf16.mxu0 0
    %628 = vmatpush1.bf16.msra.mxu0 0
    %629 = vmatprep.subr.bf16.mxu0 0
    %630 = vmatpush1.bf16.msra.mxu0 0
    %631 = vmatprep.subr.bf16.mxu0 0
    %632 = vmatpush1.bf16.msra.mxu0 0
    %633 = vmatprep.subr.bf16.mxu0 0
    %634 = vmatpush1.bf16.msra.mxu0 0
    %635 = vmatprep.subr.bf16.mxu0 0
    %636 = vmatpush1.bf16.msra.mxu0 0
    %637 = vmatprep.subr.bf16.mxu0 0
    %638 = vmatpush1.bf16.msra.mxu0 0
    %639 = vmatprep.mubr.bf16.mxu0 0
    %640 = vmatmul.mubr.bf16.gmra.mrb[0].mxu0 %v543
    %v641 = vpop.f32.mrb[0].mxu0
    %v642 = vadd.f32 0.0, %v641
    %v643 = vpop.f32.mrb[0].mxu0
    %v644 = vpop.f32.mrb[0].mxu0
    %v645 = vadd.f32 0.0, %v644
    %v646 = vpop.f32.mrb[0].mxu0
    %647 = vmatprep.mubr.bf16.mxu0 0
    %648 = vmatmul.mubr.bf16.gmra.mrb[0].mxu0 %v544
    %v649 = vpop.f32.mrb[0].mxu0
    %v650 = vadd.f32 0.0, %v649
    %v651 = vpop.f32.mrb[0].mxu0
    %v652 = vpop.f32.mrb[0].mxu0
    %v653 = vadd.f32 0.0, %v652
    %v654 = vpop.f32.mrb[0].mxu0
    %655 = vmatprep.mubr.bf16.mxu0 0
    %656 = vmatmul.mubr.bf16.gmra.mrb[0].mxu0 %v545
    %v657 = vpop.f32.mrb[0].mxu0
    %v658 = vadd.f32 0.0, %v657
    %v659 = vpop.f32.mrb[0].mxu0
    %v660 = vpop.f32.mrb[0].mxu0
    %v661 = vadd.f32 0.0, %v660
    %v662 = vpop.f32.mrb[0].mxu0
    %663 = vmatprep.mubr.bf16.mxu0 0
    %664 = vmatmul.mubr.bf16.gmra.mrb[0].mxu0 %v546
    %v665 = vpop.f32.mrb[0].mxu0
    %v666 = vadd.f32 0.0, %v665
    %v667 = vpop.f32.mrb[0].mxu0
    %v668 = vpop.f32.mrb[0].mxu0
    %v669 = vadd.f32 0.0, %v668
    %v670 = vpop.f32.mrb[0].mxu0
    %671 = vmatprep.mubr.bf16.mxu0 0
    %672 = vmatmul.mubr.bf16.gmra.mrb[0].mxu0 %v547
    %v673 = vpop.f32.mrb[0].mxu0
    %v674 = vadd.f32 0.0, %v673
    %v675 = vpop.f32.mrb[0].mxu0
    %v676 = vpop.f32.mrb[0].mxu0
    %v677 = vadd.f32 0.0, %v676
    %v678 = vpop.f32.mrb[0].mxu0
    %679 = vmatprep.mubr.bf16.mxu0 0
    %680 = vmatmul.mubr.bf16.gmra.mrb[0].mxu0 %v548
    %v681 = vpop.f32.mrb[0].mxu0
    %v682 = vadd.f32 0.0, %v681
    %v683 = vpop.f32.mrb[0].mxu0
    %v684 = vpop.f32.mrb[0].mxu0
    %v685 = vadd.f32 0.0, %v684
    %v686 = vpop.f32.mrb[0].mxu0
    %687 = vmatprep.mubr.bf16.mxu0 0
    %688 = vmatmul.mubr.bf16.gmra.mrb[0].mxu0 %v549
    %v689 = vpop.f32.mrb[0].mxu0
    %v690 = vadd.f32 0.0, %v689
    %v691 = vpop.f32.mrb[0].mxu0
    %v692 = vpop.f32.mrb[0].mxu0
    %v693 = vadd.f32 0.0, %v692
    %v694 = vpop.f32.mrb[0].mxu0
    %695 = vmatprep.mubr.bf16.mxu0 0
    %696 = vmatmul.mubr.bf16.gmra.mrb[0].mxu0 %v550
    %v697 = vpop.f32.mrb[0].mxu0
    %v698 = vadd.f32 0.0, %v697
    %v699 = vpop.f32.mrb[0].mxu0
    %v700 = vpop.f32.mrb[0].mxu0
    %v701 = vadd.f32 0.0, %v700
    %v702 = vpop.f32.mrb[0].mxu0
    %703 = vdwg.mxu0
    %v704 = vpack.c.bf16 %v645, %v642
    %v705 = vpack.c.bf16 %v653, %v650
    %v706 = vpack.c.bf16 %v661, %v658
    %v707 = vpack.c.bf16 %v669, %v666
    %v708 = vpack.c.bf16 %v677, %v674
    %v709 = vpack.c.bf16 %v685, %v682
    %v710 = vpack.c.bf16 %v693, %v690
    %v711 = vpack.c.bf16 %v701, %v698
    %v720 = vunpack.c.l.b16 %v704
    %v721 = vunpack.c.h.b16 %v704
    %v722 = vunpack.c.l.b16 %v705
    %v723 = vunpack.c.h.b16 %v705
    %v724 = vunpack.c.l.b16 %v706
    %v725 = vunpack.c.h.b16 %v706
    %v726 = vunpack.c.l.b16 %v707
    %v727 = vunpack.c.h.b16 %v707
    %v728 = vunpack.c.l.b16 %v708
    %v729 = vunpack.c.h.b16 %v708
    %v730 = vunpack.c.l.b16 %v709
    %v731 = vunpack.c.h.b16 %v709
    %v732 = vunpack.c.l.b16 %v710
    %v733 = vunpack.c.h.b16 %v710
    %v734 = vunpack.c.l.b16 %v711
    %v735 = vunpack.c.h.b16 %v711
    %v736 = vpack.c.b16 %v720, %v720
    %v737 = vpack.c.b16 %v721, %v721
    %v738 = vpack.c.b16 %v722, %v722
    %v739 = vpack.c.b16 %v723, %v723
    %v740 = vpack.c.b16 %v724, %v724
    %v741 = vpack.c.b16 %v725, %v725
    %v742 = vpack.c.b16 %v726, %v726
    %v743 = vpack.c.b16 %v727, %v727
    %v744 = vpack.c.b16 %v728, %v728
    %v745 = vpack.c.b16 %v729, %v729
    %v746 = vpack.c.b16 %v730, %v730
    %v747 = vpack.c.b16 %v731, %v731
    %v748 = vpack.c.b16 %v732, %v732
    %v749 = vpack.c.b16 %v733, %v733
    %v750 = vpack.c.b16 %v734, %v734
    %v751 = vpack.c.b16 %v735, %v735
    %768 = vst [vmem:[%s5] sm:$0xf] %v736
    %769 = vst [vmem:[%s5 + $0x4] sm:$0xf] %v737
    %770 = vst [vmem:[%s5 + $0x8] sm:$0xf] %v738
    %771 = vst [vmem:[%s5 + $0xc] sm:$0xf] %v739
    %772 = vst [vmem:[%s5 + $0x10] sm:$0xf] %v740
    %773 = vst [vmem:[%s5 + $0x14] sm:$0xf] %v741
    %774 = vst [vmem:[%s5 + $0x18] sm:$0xf] %v742
    %775 = vst [vmem:[%s5 + $0x1c] sm:$0xf] %v743
    %776 = vst [vmem:[%s5 + $0x20] sm:$0xf] %v744
    %777 = vst [vmem:[%s5 + $0x24] sm:$0xf] %v745
    %778 = vst [vmem:[%s5 + $0x28] sm:$0xf] %v746
    %779 = vst [vmem:[%s5 + $0x2c] sm:$0xf] %v747
    %780 = vst [vmem:[%s5 + $0x30] sm:$0xf] %v748
    %781 = vst [vmem:[%s5 + $0x34] sm:$0xf] %v749
    %782 = vst [vmem:[%s5 + $0x38] sm:$0xf] %v750
    %783 = vst [vmem:[%s5 + $0x3c] sm:$0xf] %v751
    %v784 = vadd.f32 %v642, %v645
    %v785 = vadd.f32 %v784, %v650
    %v786 = vadd.f32 %v785, %v653
    %v787 = vadd.f32 %v786, %v658
    %v788 = vadd.f32 %v787, %v661
    %v789 = vadd.f32 %v788, %v666
    %v790 = vadd.f32 %v789, %v669
    %v791 = vadd.f32 %v790, %v674
    %v792 = vadd.f32 %v791, %v677
    %v793 = vadd.f32 %v792, %v682
    %v794 = vadd.f32 %v793, %v685
    %v795 = vadd.f32 %v794, %v690
    %v796 = vadd.f32 %v795, %v693
    %v797 = vadd.f32 %v796, %v698
    %v798 = vadd.f32 %v797, %v701
    %v799 = vrot.slane %v798, 4
    %v800 = vadd.f32 %v798, %v799
    %v801 = vrot.slane %v800, 2
    %v802 = vadd.f32 %v800, %v801
    %v803 = vrot.slane %v802, 1
    %v804 = vadd.f32 %v802, %v803
    %805 = vst [vmem:[%s7] sm:$0x1] %v804
    %v806 = vmul.f32 %v642, %v642
    %v807 = vmul.f32 %v645, %v645
    %v808 = vmul.f32 %v650, %v650
    %v809 = vmul.f32 %v653, %v653
    %v810 = vmul.f32 %v658, %v658
    %v811 = vmul.f32 %v661, %v661
    %v812 = vmul.f32 %v666, %v666
    %v813 = vmul.f32 %v669, %v669
    %v814 = vmul.f32 %v674, %v674
    %v815 = vmul.f32 %v677, %v677
    %v816 = vmul.f32 %v682, %v682
    %v817 = vmul.f32 %v685, %v685
    %v818 = vmul.f32 %v690, %v690
    %v819 = vmul.f32 %v693, %v693
    %v820 = vmul.f32 %v698, %v698
    %v821 = vmul.f32 %v701, %v701
    %v822 = vadd.f32 %v806, %v807
    %v823 = vadd.f32 %v822, %v808
    %v824 = vadd.f32 %v823, %v809
    %v825 = vadd.f32 %v824, %v810
    %v826 = vadd.f32 %v825, %v811
    %v827 = vadd.f32 %v826, %v812
    %v828 = vadd.f32 %v827, %v813
    %v829 = vadd.f32 %v828, %v814
    %v830 = vadd.f32 %v829, %v815
    %v831 = vadd.f32 %v830, %v816
    %v832 = vadd.f32 %v831, %v817
    %v833 = vadd.f32 %v832, %v818
    %v834 = vadd.f32 %v833, %v819
    %v835 = vadd.f32 %v834, %v820
    %v836 = vadd.f32 %v835, %v821
    %v837 = vrot.slane %v836, 4
    %v838 = vadd.f32 %v836, %v837
    %v839 = vrot.slane %v838, 2
    %v840 = vadd.f32 %v838, %v839
    %v841 = vrot.slane %v840, 1
    %v842 = vadd.f32 %v840, %v841
    %843 = vst [vmem:[%s7 + $0x1] sm:$0x1] %v842
  $region25: #{basic_block_forward.4} parent=0 // pred_fallthru
    _
  // Predicated region
  $region26: #{basic_block_forward.4} parent=0 // pred_check
    _
  $region27: #{basic_block_forward.4} parent=0 // pred_check_branch
    %845 = sbr.rel (0) target = $region29
  $region28: #{basic_block_forward.4} parent=0 // pred_region
    _
  $region29: #{basic_block_forward.4} parent=0 // pred_fallthru
    _
  // Predicated region
  $region30: #{basic_block_forward.4} parent=0 // pred_check
    _
  $region31: #{basic_block_forward.4} parent=0 // pred_check_branch
    %847 = sbr.rel (0) target = $region33
  $region32: #{basic_block_forward.4} parent=0 // pred_region
    _
  $region33: #{basic_block_forward.4} parent=0 // pred_fallthru
    _
  // Predicated region
  $region34: #{basic_block_forward.4} parent=0 // pred_check
    _
  $region35: #{basic_block_forward.4} parent=0 // pred_check_branch
    %849 = sbr.rel (0) target = $region37
  $region36: #{basic_block_forward.4} parent=0 // pred_region
    _
  $region37: #{basic_block_forward.4} parent=0 // pred_fallthru
    _
  // Predicated region
  $region38: #{basic_block_forward.4} parent=0 // pred_check
    _
  $region39: #{basic_block_forward.4} parent=0 // pred_check_branch
    %851 = sbr.rel (0) target = $region41
  $region40: #{basic_block_forward.4} parent=0 // pred_region
    _
  $region41: #{basic_block_forward.4} parent=0 // pred_fallthru
    _
  // Predicated region
  $region42: #{basic_block_forward.4} parent=0 // pred_check
    _
  $region43: #{basic_block_forward.4} parent=0 // pred_check_branch
    %853 = sbr.rel (0) target = $region45
  $region44: #{basic_block_forward.4} parent=0 // pred_region
    _
  $region45: #{basic_block_forward.4} parent=0 // pred_fallthru
    _
  // Predicated region
  $region46: #{basic_block_forward.4} parent=0 // pred_check
    _
  $region47: #{basic_block_forward.4} parent=0 // pred_check_branch
    %855 = sbr.rel (0) target = $region49
  $region48: #{basic_block_forward.4} parent=0 // pred_region
    _
  $region49: #{basic_block_forward.4} parent=0 // pred_fallthru
    _
  // Predicated region
  $region50: #{basic_block_forward.4} parent=0 // pred_check
    _
  $region51: #{basic_block_forward.4} parent=0 // pred_check_branch
    %857 = sbr.rel (0) target = $region53
  $region52: #{basic_block_forward.4} parent=0 // pred_region
    _
  $region53: #{basic_block_forward.4} parent=0 // pred_fallthru
    _
  // Predicated region
  $region54: #{basic_block_forward.4} parent=0 // pred_check
    _
  $region55: #{basic_block_forward.4} parent=0 // pred_check_branch
    %859 = sbr.rel (0) target = $region57
  $region56: #{basic_block_forward.4} parent=0 // pred_region
    _
  $region57: #{basic_block_forward.4} parent=0 // pred_fallthru
    _

// kernel: basic_block_forward.6
$region0: #{basic_block_forward.6}
  #allocation0 [shape = 'u32[]', space=smem, size = 0x4, offset = 0x4, fixed_abs, tag = 'smem constant byte address 0x4 - core index']
  #allocation1 [shape = 'u32[144,128]{1,0:T(1,128)}', space=vmem, size = 0x12000, scoped, tag = 'internal scratch']
  #allocation2 [shape = 'f32[128,128]{1,0:T(8,128)}', space=vmem, size = 0x10000, scoped, tag = 'scratch operand']
  %s0 = inlined_call_operand.vmem [shape: bf16[128,128], index: 0, kind: input, shape index: {}]
  %s1 = inlined_call_operand.vmem [shape: bf16[128,128], index: 1, kind: input, shape index: {}]
  %s2 = inlined_call_operand.vmem [shape: bf16[128,128], index: 2, kind: output, shape index: {0}]
  %s3 = inlined_call_operand.vmem [shape: f32[8,128], index: 3, kind: output, shape index: {1}]
  %4 = xla_tuple %s2, %s3
  %s5 = sld [smem:[#allocation0]]
  $region34: #{basic_block_forward.6} parent=0
    _
  %s7 = ssub.s32 1, %s5
  %s8 = scalar_select 0, %s7, %s5
  // Predicated region
  $region2: #{basic_block_forward.6} parent=0 // pred_check
    _
  $region3: #{basic_block_forward.6} parent=0 // pred_check_branch
    %10 = sbr.rel (0) target = $region5
  $region4: #{basic_block_forward.6} parent=0 // pred_region
    _
  $region5: #{basic_block_forward.6} parent=0 // pred_fallthru
    _
  // Predicated region
  $region6: #{basic_block_forward.6} parent=0 // pred_check
    _
  $region7: #{basic_block_forward.6} parent=0 // pred_check_branch
    %12 = sbr.rel (0) target = $region9
  $region8: #{basic_block_forward.6} parent=0 // pred_region
    _
  $region9: #{basic_block_forward.6} parent=0 // pred_fallthru
    _
  %p14 = scmp.eq.s32.totalorder 0, 0
  // Predicated region
  $region10: #{basic_block_forward.6} parent=0 // pred_check
    %p15 = pneg %p14
  $region11: #{basic_block_forward.6} parent=0 // pred_check_branch
    %17 = sbr.rel (%p15) target = $region13
  $region12: #{basic_block_forward.6} parent=0 // pred_region
    %18 = vst [vmem:[#allocation2] sm:$0xff] 0.0
    %19 = vst [vmem:[#allocation2 + $0x8] sm:$0xff] 0.0
    %20 = vst [vmem:[#allocation2 + $0x10] sm:$0xff] 0.0
    %21 = vst [vmem:[#allocation2 + $0x18] sm:$0xff] 0.0
    %22 = vst [vmem:[#allocation2 + $0x20] sm:$0xff] 0.0
    %23 = vst [vmem:[#allocation2 + $0x28] sm:$0xff] 0.0
    %24 = vst [vmem:[#allocation2 + $0x30] sm:$0xff] 0.0
    %25 = vst [vmem:[#allocation2 + $0x38] sm:$0xff] 0.0
    %26 = vst [vmem:[#allocation2 + $0x40] sm:$0xff] 0.0
    %27 = vst [vmem:[#allocation2 + $0x48] sm:$0xff] 0.0
    %28 = vst [vmem:[#allocation2 + $0x50] sm:$0xff] 0.0
    %29 = vst [vmem:[#allocation2 + $0x58] sm:$0xff] 0.0
    %30 = vst [vmem:[#allocation2 + $0x60] sm:$0xff] 0.0
    %31 = vst [vmem:[#allocation2 + $0x68] sm:$0xff] 0.0
    %32 = vst [vmem:[#allocation2 + $0x70] sm:$0xff] 0.0
    %33 = vst [vmem:[#allocation2 + $0x78] sm:$0xff] 0.0
  $region13: #{basic_block_forward.6} parent=0 // pred_fallthru
    _
  %s34 = smul.u32 0, 128
  %v35 = vld [vmem:[#allocation2] sm:$0xff]
  %v36 = vld [vmem:[#allocation2 + $0x8] sm:$0xff]
  %v37 = vld [vmem:[#allocation2 + $0x10] sm:$0xff]
  %v38 = vld [vmem:[#allocation2 + $0x18] sm:$0xff]
  %v39 = vld [vmem:[#allocation2 + $0x20] sm:$0xff]
  %v40 = vld [vmem:[#allocation2 + $0x28] sm:$0xff]
  %v41 = vld [vmem:[#allocation2 + $0x30] sm:$0xff]
  %v42 = vld [vmem:[#allocation2 + $0x38] sm:$0xff]
  %v43 = vld [vmem:[#allocation2 + $0x40] sm:$0xff]
  %v44 = vld [vmem:[#allocation2 + $0x48] sm:$0xff]
  %v45 = vld [vmem:[#allocation2 + $0x50] sm:$0xff]
  %v46 = vld [vmem:[#allocation2 + $0x58] sm:$0xff]
  %v47 = vld [vmem:[#allocation2 + $0x60] sm:$0xff]
  %v48 = vld [vmem:[#allocation2 + $0x68] sm:$0xff]
  %v49 = vld [vmem:[#allocation2 + $0x70] sm:$0xff]
  %v50 = vld [vmem:[#allocation2 + $0x78] sm:$0xff]
  %v51 = vld [vmem:[%s0] sm:$0xf]
  %v52 = vld [vmem:[%s0 + $0x4] sm:$0xf]
  %v53 = vld [vmem:[%s0 + $0x8] sm:$0xf]
  %v54 = vld [vmem:[%s0 + $0xc] sm:$0xf]
  %v55 = vld [vmem:[%s0 + $0x10] sm:$0xf]
  %v56 = vld [vmem:[%s0 + $0x14] sm:$0xf]
  %v57 = vld [vmem:[%s0 + $0x18] sm:$0xf]
  %v58 = vld [vmem:[%s0 + $0x1c] sm:$0xf]
  %v59 = vld [vmem:[%s0 + $0x20] sm:$0xf]
  %v60 = vld [vmem:[%s0 + $0x24] sm:$0xf]
  %v61 = vld [vmem:[%s0 + $0x28] sm:$0xf]
  %v62 = vld [vmem:[%s0 + $0x2c] sm:$0xf]
  %v63 = vld [vmem:[%s0 + $0x30] sm:$0xf]
  %v64 = vld [vmem:[%s0 + $0x34] sm:$0xf]
  %v65 = vld [vmem:[%s0 + $0x38] sm:$0xf]
  %v66 = vld [vmem:[%s0 + $0x3c] sm:$0xf]
  %s67 = sshra.s32 %s34, 3
  %s68 = sand.u32 %s34, 7
  %s69 = smul.addr %s67, 4
  %s70 = scalar_lea.vmem %s1, %s69
  %v71 = vld [vmem:[%s70] sm:$0xf]
  %v72 = vld [vmem:[%s70 + $0x4] sm:$0xf]
  %v73 = vld [vmem:[%s70 + $0x8] sm:$0xf]
  %v74 = vld [vmem:[%s70 + $0xc] sm:$0xf]
  %v75 = vld [vmem:[%s70 + $0x10] sm:$0xf]
  %v76 = vld [vmem:[%s70 + $0x14] sm:$0xf]
  %v77 = vld [vmem:[%s70 + $0x18] sm:$0xf]
  %v78 = vld [vmem:[%s70 + $0x1c] sm:$0xf]
  %v79 = vld [vmem:[%s70 + $0x20] sm:$0xf]
  %v80 = vld [vmem:[%s70 + $0x24] sm:$0xf]
  %v81 = vld [vmem:[%s70 + $0x28] sm:$0xf]
  %v82 = vld [vmem:[%s70 + $0x2c] sm:$0xf]
  %v83 = vld [vmem:[%s70 + $0x30] sm:$0xf]
  %v84 = vld [vmem:[%s70 + $0x34] sm:$0xf]
  %v85 = vld [vmem:[%s70 + $0x38] sm:$0xf]
  %v86 = vld [vmem:[%s70 + $0x3c] sm:$0xf]
  %v103 = vunpack.c.l.b16 %v51
  %v104 = vunpack.c.l.b16 %v52
  %v105 = vunpack.c.l.b16 %v53
  %v106 = vunpack.c.l.b16 %v54
  %v107 = vunpack.c.l.b16 %v55
  %v108 = vunpack.c.l.b16 %v56
  %v109 = vunpack.c.l.b16 %v57
  %v110 = vunpack.c.l.b16 %v58
  %v111 = vunpack.c.l.b16 %v59
  %v112 = vunpack.c.l.b16 %v60
  %v113 = vunpack.c.l.b16 %v61
  %v114 = vunpack.c.l.b16 %v62
  %v115 = vunpack.c.l.b16 %v63
  %v116 = vunpack.c.l.b16 %v64
  %v117 = vunpack.c.l.b16 %v65
  %v118 = vunpack.c.l.b16 %v66
  %v119 = vpack.c.b16 %v104, %v103
  %v120 = vpack.c.b16 %v106, %v105
  %v121 = vpack.c.b16 %v108, %v107
  %v122 = vpack.c.b16 %v110, %v109
  %v123 = vpack.c.b16 %v112, %v111
  %v124 = vpack.c.b16 %v114, %v113
  %v125 = vpack.c.b16 %v116, %v115
  %v126 = vpack.c.b16 %v118, %v117
  %v151 = vunpack.c.l.b16 %v71
  %v152 = vunpack.c.l.b16 %v72
  %v153 = vunpack.c.l.b16 %v73
  %v154 = vunpack.c.l.b16 %v74
  %v155 = vunpack.c.l.b16 %v75
  %v156 = vunpack.c.l.b16 %v76
  %v157 = vunpack.c.l.b16 %v77
  %v158 = vunpack.c.l.b16 %v78
  %v159 = vunpack.c.l.b16 %v79
  %v160 = vunpack.c.l.b16 %v80
  %v161 = vunpack.c.l.b16 %v81
  %v162 = vunpack.c.l.b16 %v82
  %v163 = vunpack.c.l.b16 %v83
  %v164 = vunpack.c.l.b16 %v84
  %v165 = vunpack.c.l.b16 %v85
  %v166 = vunpack.c.l.b16 %v86
  %v167 = vpack.c.b16 %v152, %v151
  %v168 = vpack.c.b16 %v154, %v153
  %v169 = vpack.c.b16 %v156, %v155
  %v170 = vpack.c.b16 %v158, %v157
  %v171 = vpack.c.b16 %v160, %v159
  %v172 = vpack.c.b16 %v162, %v161
  %v173 = vpack.c.b16 %v164, %v163
  %v174 = vpack.c.b16 %v166, %v165
  %183 = vmatprep.subr.bf16.mxu0 0
  %184 = vmatpush1.bf16.msra.mxu0 %v167
  %185 = vmatprep.subr.bf16.mxu0 0
  %186 = vmatpush1.bf16.msra.mxu0 %v168
  %187 = vmatprep.subr.bf16.mxu0 0
  %188 = vmatpush1.bf16.msra.mxu0 %v169
  %189 = vmatprep.subr.bf16.mxu0 0
  %190 = vmatpush1.bf16.msra.mxu0 %v170
  %191 = vmatprep.subr.bf16.mxu0 0
  %192 = vmatpush1.bf16.msra.mxu0 %v171
  %193 = vmatprep.subr.bf16.mxu0 0
  %194 = vmatpush1.bf16.msra.mxu0 %v172
  %195 = vmatprep.subr.bf16.mxu0 0
  %196 = vmatpush1.bf16.msra.mxu0 %v173
  %197 = vmatprep.subr.bf16.mxu0 0
  %198 = vmatpush1.bf16.msra.mxu0 %v174
  %199 = vmatprep.subr.bf16.mxu0 0
  %200 = vmatpush1.bf16.msra.mxu0 0
  %201 = vmatprep.subr.bf16.mxu0 0
  %202 = vmatpush1.bf16.msra.mxu0 0
  %203 = vmatprep.subr.bf16.mxu0 0
  %204 = vmatpush1.bf16.msra.mxu0 0
  %205 = vmatprep.subr.bf16.mxu0 0
  %206 = vmatpush1.bf16.msra.mxu0 0
  %207 = vmatprep.subr.bf16.mxu0 0
  %208 = vmatpush1.bf16.msra.mxu0 0
  %209 = vmatprep.subr.bf16.mxu0 0
  %210 = vmatpush1.bf16.msra.mxu0 0
  %211 = vmatprep.subr.bf16.mxu0 0
  %212 = vmatpush1.bf16.msra.mxu0 0
  %213 = vmatprep.subr.bf16.mxu0 0
  %214 = vmatpush1.bf16.msra.mxu0 0
  %215 = vmatprep.mubr.bf16.mxu0 0
  %216 = vmatmul.mubr.bf16.gmra.mrb[0].mxu0 %v119
  %v217 = vpop.f32.mrb[0].mxu0
  %v218 = vadd.f32 0.0, %v217
  %v219 = vpop.f32.mrb[0].mxu0
  %v220 = vpop.f32.mrb[0].mxu0
  %v221 = vadd.f32 0.0, %v220
  %v222 = vpop.f32.mrb[0].mxu0
  %223 = vmatprep.mubr.bf16.mxu0 0
  %224 = vmatmul.mubr.bf16.gmra.mrb[0].mxu0 %v120
  %v225 = vpop.f32.mrb[0].mxu0
  %v226 = vadd.f32 0.0, %v225
  %v227 = vpop.f32.mrb[0].mxu0
  %v228 = vpop.f32.mrb[0].mxu0
  %v229 = vadd.f32 0.0, %v228
  %v230 = vpop.f32.mrb[0].mxu0
  %231 = vmatprep.mubr.bf16.mxu0 0
  %232 = vmatmul.mubr.bf16.gmra.mrb[0].mxu0 %v121
  %v233 = vpop.f32.mrb[0].mxu0
  %v234 = vadd.f32 0.0, %v233
  %v235 = vpop.f32.mrb[0].mxu0
  %v236 = vpop.f32.mrb[0].mxu0
  %v237 = vadd.f32 0.0, %v236
  %v238 = vpop.f32.mrb[0].mxu0
  %239 = vmatprep.mubr.bf16.mxu0 0
  %240 = vmatmul.mubr.bf16.gmra.mrb[0].mxu0 %v122
  %v241 = vpop.f32.mrb[0].mxu0
  %v242 = vadd.f32 0.0, %v241
  %v243 = vpop.f32.mrb[0].mxu0
  %v244 = vpop.f32.mrb[0].mxu0
  %v245 = vadd.f32 0.0, %v244
  %v246 = vpop.f32.mrb[0].mxu0
  %247 = vmatprep.mubr.bf16.mxu0 0
  %248 = vmatmul.mubr.bf16.gmra.mrb[0].mxu0 %v123
  %v249 = vpop.f32.mrb[0].mxu0
  %v250 = vadd.f32 0.0, %v249
  %v251 = vpop.f32.mrb[0].mxu0
  %v252 = vpop.f32.mrb[0].mxu0
  %v253 = vadd.f32 0.0, %v252
  %v254 = vpop.f32.mrb[0].mxu0
  %255 = vmatprep.mubr.bf16.mxu0 0
  %256 = vmatmul.mubr.bf16.gmra.mrb[0].mxu0 %v124
  %v257 = vpop.f32.mrb[0].mxu0
  %v258 = vadd.f32 0.0, %v257
  %v259 = vpop.f32.mrb[0].mxu0
  %v260 = vpop.f32.mrb[0].mxu0
  %v261 = vadd.f32 0.0, %v260
  %v262 = vpop.f32.mrb[0].mxu0
  %263 = vmatprep.mubr.bf16.mxu0 0
  %264 = vmatmul.mubr.bf16.gmra.mrb[0].mxu0 %v125
  %v265 = vpop.f32.mrb[0].mxu0
  %v266 = vadd.f32 0.0, %v265
  %v267 = vpop.f32.mrb[0].mxu0
  %v268 = vpop.f32.mrb[0].mxu0
  %v269 = vadd.f32 0.0, %v268
  %v270 = vpop.f32.mrb[0].mxu0
  %271 = vmatprep.mubr.bf16.mxu0 0
  %272 = vmatmul.mubr.bf16.gmra.mrb[0].mxu0 %v126
  %v273 = vpop.f32.mrb[0].mxu0
  %v274 = vadd.f32 0.0, %v273
  %v275 = vpop.f32.mrb[0].mxu0
  %v276 = vpop.f32.mrb[0].mxu0
  %v277 = vadd.f32 0.0, %v276
  %v278 = vpop.f32.mrb[0].mxu0
  %279 = vdwg.mxu0
  %v280 = vadd.f32 %v35, %v218
  %v281 = vadd.f32 %v36, %v221
  %v282 = vadd.f32 %v37, %v226
  %v283 = vadd.f32 %v38, %v229
  %v284 = vadd.f32 %v39, %v234
  %v285 = vadd.f32 %v40, %v237
  %v286 = vadd.f32 %v41, %v242
  %v287 = vadd.f32 %v42, %v245
  %v288 = vadd.f32 %v43, %v250
  %v289 = vadd.f32 %v44, %v253
  %v290 = vadd.f32 %v45, %v258
  %v291 = vadd.f32 %v46, %v261
  %v292 = vadd.f32 %v47, %v266
  %v293 = vadd.f32 %v48, %v269
  %v294 = vadd.f32 %v49, %v274
  %v295 = vadd.f32 %v50, %v277
  %296 = vst [vmem:[#allocation2] sm:$0xff] %v280
  %297 = vst [vmem:[#allocation2 + $0x8] sm:$0xff] %v281
  %298 = vst [vmem:[#allocation2 + $0x10] sm:$0xff] %v282
  %299 = vst [vmem:[#allocation2 + $0x18] sm:$0xff] %v283
  %300 = vst [vmem:[#allocation2 + $0x20] sm:$0xff] %v284
  %301 = vst [vmem:[#allocation2 + $0x28] sm:$0xff] %v285
  %302 = vst [vmem:[#allocation2 + $0x30] sm:$0xff] %v286
  %303 = vst [vmem:[#allocation2 + $0x38] sm:$0xff] %v287
  %304 = vst [vmem:[#allocation2 + $0x40] sm:$0xff] %v288
  %305 = vst [vmem:[#allocation2 + $0x48] sm:$0xff] %v289
  %306 = vst [vmem:[#allocation2 + $0x50] sm:$0xff] %v290
  %307 = vst [vmem:[#allocation2 + $0x58] sm:$0xff] %v291
  %308 = vst [vmem:[#allocation2 + $0x60] sm:$0xff] %v292
  %309 = vst [vmem:[#allocation2 + $0x68] sm:$0xff] %v293
  %310 = vst [vmem:[#allocation2 + $0x70] sm:$0xff] %v294
  %311 = vst [vmem:[#allocation2 + $0x78] sm:$0xff] %v295
  // Predicated region
  $region14: #{basic_block_forward.6} parent=0 // pred_check
    %p312 = pneg %p14
  $region15: #{basic_block_forward.6} parent=0 // pred_check_branch
    %314 = sbr.rel (%p312) target = $region17
  $region16: #{basic_block_forward.6} parent=0 // pred_region
    %v315 = vld [vmem:[#allocation2] sm:$0xff]
    %v316 = vld [vmem:[#allocation2 + $0x8] sm:$0xff]
    %v317 = vld [vmem:[#allocation2 + $0x10] sm:$0xff]
    %v318 = vld [vmem:[#allocation2 + $0x18] sm:$0xff]
    %v319 = vld [vmem:[#allocation2 + $0x20] sm:$0xff]
    %v320 = vld [vmem:[#allocation2 + $0x28] sm:$0xff]
    %v321 = vld [vmem:[#allocation2 + $0x30] sm:$0xff]
    %v322 = vld [vmem:[#allocation2 + $0x38] sm:$0xff]
    %v323 = vld [vmem:[#allocation2 + $0x40] sm:$0xff]
    %v324 = vld [vmem:[#allocation2 + $0x48] sm:$0xff]
    %v325 = vld [vmem:[#allocation2 + $0x50] sm:$0xff]
    %v326 = vld [vmem:[#allocation2 + $0x58] sm:$0xff]
    %v327 = vld [vmem:[#allocation2 + $0x60] sm:$0xff]
    %v328 = vld [vmem:[#allocation2 + $0x68] sm:$0xff]
    %v329 = vld [vmem:[#allocation2 + $0x70] sm:$0xff]
    %v330 = vld [vmem:[#allocation2 + $0x78] sm:$0xff]
    %v331 = vpack.c.bf16 %v316, %v315
    %v332 = vpack.c.bf16 %v318, %v317
    %v333 = vpack.c.bf16 %v320, %v319
    %v334 = vpack.c.bf16 %v322, %v321
    %v335 = vpack.c.bf16 %v324, %v323
    %v336 = vpack.c.bf16 %v326, %v325
    %v337 = vpack.c.bf16 %v328, %v327
    %v338 = vpack.c.bf16 %v330, %v329
    %v347 = vunpack.c.l.b16 %v331
    %v348 = vunpack.c.h.b16 %v331
    %v349 = vunpack.c.l.b16 %v332
    %v350 = vunpack.c.h.b16 %v332
    %v351 = vunpack.c.l.b16 %v333
    %v352 = vunpack.c.h.b16 %v333
    %v353 = vunpack.c.l.b16 %v334
    %v354 = vunpack.c.h.b16 %v334
    %v355 = vunpack.c.l.b16 %v335
    %v356 = vunpack.c.h.b16 %v335
    %v357 = vunpack.c.l.b16 %v336
    %v358 = vunpack.c.h.b16 %v336
    %v359 = vunpack.c.l.b16 %v337
    %v360 = vunpack.c.h.b16 %v337
    %v361 = vunpack.c.l.b16 %v338
    %v362 = vunpack.c.h.b16 %v338
    %v363 = vpack.c.b16 %v347, %v347
    %v364 = vpack.c.b16 %v348, %v348
    %v365 = vpack.c.b16 %v349, %v349
    %v366 = vpack.c.b16 %v350, %v350
    %v367 = vpack.c.b16 %v351, %v351
    %v368 = vpack.c.b16 %v352, %v352
    %v369 = vpack.c.b16 %v353, %v353
    %v370 = vpack.c.b16 %v354, %v354
    %v371 = vpack.c.b16 %v355, %v355
    %v372 = vpack.c.b16 %v356, %v356
    %v373 = vpack.c.b16 %v357, %v357
    %v374 = vpack.c.b16 %v358, %v358
    %v375 = vpack.c.b16 %v359, %v359
    %v376 = vpack.c.b16 %v360, %v360
    %v377 = vpack.c.b16 %v361, %v361
    %v378 = vpack.c.b16 %v362, %v362
    %395 = vst [vmem:[%s2] sm:$0xf] %v363
    %396 = vst [vmem:[%s2 + $0x4] sm:$0xf] %v364
    %397 = vst [vmem:[%s2 + $0x8] sm:$0xf] %v365
    %398 = vst [vmem:[%s2 + $0xc] sm:$0xf] %v366
    %399 = vst [vmem:[%s2 + $0x10] sm:$0xf] %v367
    %400 = vst [vmem:[%s2 + $0x14] sm:$0xf] %v368
    %401 = vst [vmem:[%s2 + $0x18] sm:$0xf] %v369
    %402 = vst [vmem:[%s2 + $0x1c] sm:$0xf] %v370
    %403 = vst [vmem:[%s2 + $0x20] sm:$0xf] %v371
    %404 = vst [vmem:[%s2 + $0x24] sm:$0xf] %v372
    %405 = vst [vmem:[%s2 + $0x28] sm:$0xf] %v373
    %406 = vst [vmem:[%s2 + $0x2c] sm:$0xf] %v374
    %407 = vst [vmem:[%s2 + $0x30] sm:$0xf] %v375
    %408 = vst [vmem:[%s2 + $0x34] sm:$0xf] %v376
    %409 = vst [vmem:[%s2 + $0x38] sm:$0xf] %v377
    %410 = vst [vmem:[%s2 + $0x3c] sm:$0xf] %v378
    %v411 = vadd.f32 %v315, %v316
    %v412 = vadd.f32 %v411, %v317
    %v413 = vadd.f32 %v412, %v318
    %v414 = vadd.f32 %v413, %v319
    %v415 = vadd.f32 %v414, %v320
    %v416 = vadd.f32 %v415, %v321
    %v417 = vadd.f32 %v416, %v322
    %v418 = vadd.f32 %v417, %v323
    %v419 = vadd.f32 %v418, %v324
    %v420 = vadd.f32 %v419, %v325
    %v421 = vadd.f32 %v420, %v326
    %v422 = vadd.f32 %v421, %v327
    %v423 = vadd.f32 %v422, %v328
    %v424 = vadd.f32 %v423, %v329
    %v425 = vadd.f32 %v424, %v330
    %v426 = vrot.slane %v425, 4
    %v427 = vadd.f32 %v425, %v426
    %v428 = vrot.slane %v427, 2
    %v429 = vadd.f32 %v427, %v428
    %v430 = vrot.slane %v429, 1
    %v431 = vadd.f32 %v429, %v430
    %432 = vst [vmem:[%s3] sm:$0x1] %v431
    %v433 = vmul.f32 %v315, %v315
    %v434 = vmul.f32 %v316, %v316
    %v435 = vmul.f32 %v317, %v317
    %v436 = vmul.f32 %v318, %v318
    %v437 = vmul.f32 %v319, %v319
    %v438 = vmul.f32 %v320, %v320
    %v439 = vmul.f32 %v321, %v321
    %v440 = vmul.f32 %v322, %v322
    %v441 = vmul.f32 %v323, %v323
    %v442 = vmul.f32 %v324, %v324
    %v443 = vmul.f32 %v325, %v325
    %v444 = vmul.f32 %v326, %v326
    %v445 = vmul.f32 %v327, %v327
    %v446 = vmul.f32 %v328, %v328
    %v447 = vmul.f32 %v329, %v329
    %v448 = vmul.f32 %v330, %v330
    %v449 = vadd.f32 %v433, %v434
    %v450 = vadd.f32 %v449, %v435
    %v451 = vadd.f32 %v450, %v436
    %v452 = vadd.f32 %v451, %v437
    %v453 = vadd.f32 %v452, %v438
    %v454 = vadd.f32 %v453, %v439
    %v455 = vadd.f32 %v454, %v440
    %v456 = vadd.f32 %v455, %v441
    %v457 = vadd.f32 %v456, %v442
    %v458 = vadd.f32 %v457, %v443
    %v459 = vadd.f32 %v458, %v444
    %v460 = vadd.f32 %v459, %v445
    %v461 = vadd.f32 %v460, %v446
    %v462 = vadd.f32 %v461, %v447
    %v463 = vadd.f32 %v462, %v448
    %v464 = vrot.slane %v463, 4
    %v465 = vadd.f32 %v463, %v464
    %v466 = vrot.slane %v465, 2
    %v467 = vadd.f32 %v465, %v466
    %v468 = vrot.slane %v467, 1
    %v469 = vadd.f32 %v467, %v468
    %470 = vst [vmem:[%s3 + $0x1] sm:$0x1] %v469
  $region17: #{basic_block_forward.6} parent=0 // pred_fallthru
    _
  // Predicated region
  $region18: #{basic_block_forward.6} parent=0 // pred_check
    _
  $region19: #{basic_block_forward.6} parent=0 // pred_check_branch
    %472 = sbr.rel (0) target = $region21
  $region20: #{basic_block_forward.6} parent=0 // pred_region
    _
  $region21: #{basic_block_forward.6} parent=0 // pred_fallthru
    _
  // Predicated region
  $region22: #{basic_block_forward.6} parent=0 // pred_check
    _
  $region23: #{basic_block_forward.6} parent=0 // pred_check_branch
    %474 = sbr.rel (0) target = $region25
  $region24: #{basic_block_forward.6} parent=0 // pred_region
    _
  $region25: #{basic_block_forward.6} parent=0 // pred_fallthru
    _
  // Predicated region
  $region26: #{basic_block_forward.6} parent=0 // pred_check
    _
  $region27: #{basic_block_forward.6} parent=0 // pred_check_branch
    %476 = sbr.rel (0) target = $region29
  $region28: #{basic_block_forward.6} parent=0 // pred_region
    _
  $region29: #{basic_block_forward.6} parent=0 // pred_fallthru
    _
  // Predicated region
  $region30: #{basic_block_forward.6} parent=0 // pred_check
    _
  $region31: #{basic_block_forward.6} parent=0 // pred_check_branch
    %478 = sbr.rel (0) target = $region33
  $region32: #{basic_block_forward.6} parent=0 // pred_region
    _
  $region33: #{basic_block_forward.6} parent=0 // pred_fallthru
    _

// kernel: basic_block_forward.7
$region0: #{basic_block_forward.7}
  #allocation0 [shape = 'u32[]', space=smem, size = 0x4, offset = 0x4, fixed_abs, tag = 'smem constant byte address 0x4 - core index']
  #allocation1 [shape = 'u32[144,128]{1,0:T(1,128)}', space=vmem, size = 0x12000, scoped, tag = 'internal scratch']
  %s0 = inlined_call_operand.vmem [shape: bf16[128,128], index: 0, kind: input, shape index: {}]
  %s1 = inlined_call_operand.vmem [shape: bf16[128,128], index: 1, kind: input, shape index: {}]
  %s2 = inlined_call_operand.vmem [shape: f32[1,128], index: 2, kind: input, shape index: {}]
  %s3 = inlined_call_operand.vmem [shape: f32[1,128], index: 3, kind: input, shape index: {}]
  %s4 = inlined_call_operand.vmem [shape: f32[1,128], index: 4, kind: input, shape index: {}]
  %s5 = inlined_call_operand.vmem [shape: f32[1,128], index: 5, kind: input, shape index: {}]
  %s6 = inlined_call_operand.vmem [shape: f32[128,128], index: 6, kind: output, shape index: {}]
  %s7 = sld [smem:[#allocation0]]
  $region34: #{basic_block_forward.7} parent=0
    _
  %s9 = ssub.s32 1, %s7
  %s10 = scalar_select 0, %s9, %s7
  // Predicated region
  $region2: #{basic_block_forward.7} parent=0 // pred_check
    _
  $region3: #{basic_block_forward.7} parent=0 // pred_check_branch
    %12 = sbr.rel (0) target = $region5
  $region4: #{basic_block_forward.7} parent=0 // pred_region
    _
  $region5: #{basic_block_forward.7} parent=0 // pred_fallthru
    _
  // Predicated region
  $region6: #{basic_block_forward.7} parent=0 // pred_check
    _
  $region7: #{basic_block_forward.7} parent=0 // pred_check_branch
    %14 = sbr.rel (0) target = $region9
  $region8: #{basic_block_forward.7} parent=0 // pred_region
    _
  $region9: #{basic_block_forward.7} parent=0 // pred_fallthru
    _
  // Predicated region
  $region10: #{basic_block_forward.7} parent=0 // pred_check
    _
  $region11: #{basic_block_forward.7} parent=0 // pred_check_branch
    %16 = sbr.rel (0) target = $region13
  $region12: #{basic_block_forward.7} parent=0 // pred_region
    _
  $region13: #{basic_block_forward.7} parent=0 // pred_fallthru
    _
  // Predicated region
  $region14: #{basic_block_forward.7} parent=0 // pred_check
    _
  $region15: #{basic_block_forward.7} parent=0 // pred_check_branch
    %18 = sbr.rel (0) target = $region17
  $region16: #{basic_block_forward.7} parent=0 // pred_region
    _
  $region17: #{basic_block_forward.7} parent=0 // pred_fallthru
    _
  // Predicated region
  $region18: #{basic_block_forward.7} parent=0 // pred_check
    _
  $region19: #{basic_block_forward.7} parent=0 // pred_check_branch
    %20 = sbr.rel (0) target = $region21
  $region20: #{basic_block_forward.7} parent=0 // pred_region
    _
  $region21: #{basic_block_forward.7} parent=0 // pred_fallthru
    _
  // Predicated region
  $region22: #{basic_block_forward.7} parent=0 // pred_check
    _
  $region23: #{basic_block_forward.7} parent=0 // pred_check_branch
    %22 = sbr.rel (0) target = $region25
  $region24: #{basic_block_forward.7} parent=0 // pred_region
    _
  $region25: #{basic_block_forward.7} parent=0 // pred_fallthru
    _
  %v23 = vld [vmem:[%s0] sm:$0xf]
  %v24 = vld [vmem:[%s0 + $0x4] sm:$0xf]
  %v25 = vld [vmem:[%s0 + $0x8] sm:$0xf]
  %v26 = vld [vmem:[%s0 + $0xc] sm:$0xf]
  %v27 = vld [vmem:[%s0 + $0x10] sm:$0xf]
  %v28 = vld [vmem:[%s0 + $0x14] sm:$0xf]
  %v29 = vld [vmem:[%s0 + $0x18] sm:$0xf]
  %v30 = vld [vmem:[%s0 + $0x1c] sm:$0xf]
  %v31 = vld [vmem:[%s0 + $0x20] sm:$0xf]
  %v32 = vld [vmem:[%s0 + $0x24] sm:$0xf]
  %v33 = vld [vmem:[%s0 + $0x28] sm:$0xf]
  %v34 = vld [vmem:[%s0 + $0x2c] sm:$0xf]
  %v35 = vld [vmem:[%s0 + $0x30] sm:$0xf]
  %v36 = vld [vmem:[%s0 + $0x34] sm:$0xf]
  %v37 = vld [vmem:[%s0 + $0x38] sm:$0xf]
  %v38 = vld [vmem:[%s0 + $0x3c] sm:$0xf]
  %v39 = vld [vmem:[%s2] sm:$0x1]
  %v40 = vunpack.c.l.bf16 %v23
  %v41 = vunpack.c.l.bf16 %v24
  %v42 = vunpack.c.l.bf16 %v25
  %v43 = vunpack.c.l.bf16 %v26
  %v44 = vunpack.c.l.bf16 %v27
  %v45 = vunpack.c.l.bf16 %v28
  %v46 = vunpack.c.l.bf16 %v29
  %v47 = vunpack.c.l.bf16 %v30
  %v48 = vunpack.c.l.bf16 %v31
  %v49 = vunpack.c.l.bf16 %v32
  %v50 = vunpack.c.l.bf16 %v33
  %v51 = vunpack.c.l.bf16 %v34
  %v52 = vunpack.c.l.bf16 %v35
  %v53 = vunpack.c.l.bf16 %v36
  %v54 = vunpack.c.l.bf16 %v37
  %v55 = vunpack.c.l.bf16 %v38
  %v57 = vlaneseq
  %v58 = vshrl.u32 %v57, 7
  %v59 = vsub.s32 0, %v58
  %v60 = vrot.slane %v39, %v59
  %v62 = vmul.f32 %v40, %v60
  %v63 = vmul.f32 %v41, %v60
  %v64 = vmul.f32 %v42, %v60
  %v65 = vmul.f32 %v43, %v60
  %v66 = vmul.f32 %v44, %v60
  %v67 = vmul.f32 %v45, %v60
  %v68 = vmul.f32 %v46, %v60
  %v69 = vmul.f32 %v47, %v60
  %v70 = vmul.f32 %v48, %v60
  %v71 = vmul.f32 %v49, %v60
  %v72 = vmul.f32 %v50, %v60
  %v73 = vmul.f32 %v51, %v60
  %v74 = vmul.f32 %v52, %v60
  %v75 = vmul.f32 %v53, %v60
  %v76 = vmul.f32 %v54, %v60
  %v77 = vmul.f32 %v55, %v60
  %v78 = vld [vmem:[%s3] sm:$0x1]
  %v80 = vlaneseq
  %v81 = vshrl.u32 %v80, 7
  %v82 = vsub.s32 0, %v81
  %v83 = vrot.slane %v78, %v82
  %v85 = vadd.f32 %v62, %v83
  %v86 = vadd.f32 %v63, %v83
  %v87 = vadd.f32 %v64, %v83
  %v88 = vadd.f32 %v65, %v83
  %v89 = vadd.f32 %v66, %v83
  %v90 = vadd.f32 %v67, %v83
  %v91 = vadd.f32 %v68, %v83
  %v92 = vadd.f32 %v69, %v83
  %v93 = vadd.f32 %v70, %v83
  %v94 = vadd.f32 %v71, %v83
  %v95 = vadd.f32 %v72, %v83
  %v96 = vadd.f32 %v73, %v83
  %v97 = vadd.f32 %v74, %v83
  %v98 = vadd.f32 %v75, %v83
  %v99 = vadd.f32 %v76, %v83
  %v100 = vadd.f32 %v77, %v83
  %v101 = vmax.f32 %v85, 0.0
  %v102 = vmax.f32 %v86, 0.0
  %v103 = vmax.f32 %v87, 0.0
  %v104 = vmax.f32 %v88, 0.0
  %v105 = vmax.f32 %v89, 0.0
  %v106 = vmax.f32 %v90, 0.0
  %v107 = vmax.f32 %v91, 0.0
  %v108 = vmax.f32 %v92, 0.0
  %v109 = vmax.f32 %v93, 0.0
  %v110 = vmax.f32 %v94, 0.0
  %v111 = vmax.f32 %v95, 0.0
  %v112 = vmax.f32 %v96, 0.0
  %v113 = vmax.f32 %v97, 0.0
  %v114 = vmax.f32 %v98, 0.0
  %v115 = vmax.f32 %v99, 0.0
  %v116 = vmax.f32 %v100, 0.0
  %v117 = vld [vmem:[%s1] sm:$0xf]
  %v118 = vld [vmem:[%s1 + $0x4] sm:$0xf]
  %v119 = vld [vmem:[%s1 + $0x8] sm:$0xf]
  %v120 = vld [vmem:[%s1 + $0xc] sm:$0xf]
  %v121 = vld [vmem:[%s1 + $0x10] sm:$0xf]
  %v122 = vld [vmem:[%s1 + $0x14] sm:$0xf]
  %v123 = vld [vmem:[%s1 + $0x18] sm:$0xf]
  %v124 = vld [vmem:[%s1 + $0x1c] sm:$0xf]
  %v125 = vld [vmem:[%s1 + $0x20] sm:$0xf]
  %v126 = vld [vmem:[%s1 + $0x24] sm:$0xf]
  %v127 = vld [vmem:[%s1 + $0x28] sm:$0xf]
  %v128 = vld [vmem:[%s1 + $0x2c] sm:$0xf]
  %v129 = vld [vmem:[%s1 + $0x30] sm:$0xf]
  %v130 = vld [vmem:[%s1 + $0x34] sm:$0xf]
  %v131 = vld [vmem:[%s1 + $0x38] sm:$0xf]
  %v132 = vld [vmem:[%s1 + $0x3c] sm:$0xf]
  %v133 = vld [vmem:[%s4] sm:$0x1]
  %v134 = vunpack.c.l.bf16 %v117
  %v135 = vunpack.c.l.bf16 %v118
  %v136 = vunpack.c.l.bf16 %v119
  %v137 = vunpack.c.l.bf16 %v120
  %v138 = vunpack.c.l.bf16 %v121
  %v139 = vunpack.c.l.bf16 %v122
  %v140 = vunpack.c.l.bf16 %v123
  %v141 = vunpack.c.l.bf16 %v124
  %v142 = vunpack.c.l.bf16 %v125
  %v143 = vunpack.c.l.bf16 %v126
  %v144 = vunpack.c.l.bf16 %v127
  %v145 = vunpack.c.l.bf16 %v128
  %v146 = vunpack.c.l.bf16 %v129
  %v147 = vunpack.c.l.bf16 %v130
  %v148 = vunpack.c.l.bf16 %v131
  %v149 = vunpack.c.l.bf16 %v132
  %v151 = vlaneseq
  %v152 = vshrl.u32 %v151, 7
  %v153 = vsub.s32 0, %v152
  %v154 = vrot.slane %v133, %v153
  %v156 = vmul.f32 %v134, %v154
  %v157 = vmul.f32 %v135, %v154
  %v158 = vmul.f32 %v136, %v154
  %v159 = vmul.f32 %v137, %v154
  %v160 = vmul.f32 %v138, %v154
  %v161 = vmul.f32 %v139, %v154
  %v162 = vmul.f32 %v140, %v154
  %v163 = vmul.f32 %v141, %v154
  %v164 = vmul.f32 %v142, %v154
  %v165 = vmul.f32 %v143, %v154
  %v166 = vmul.f32 %v144, %v154
  %v167 = vmul.f32 %v145, %v154
  %v168 = vmul.f32 %v146, %v154
  %v169 = vmul.f32 %v147, %v154
  %v170 = vmul.f32 %v148, %v154
  %v171 = vmul.f32 %v149, %v154
  %v172 = vld [vmem:[%s5] sm:$0x1]
  %v174 = vlaneseq
  %v175 = vshrl.u32 %v174, 7
  %v176 = vsub.s32 0, %v175
  %v177 = vrot.slane %v172, %v176
  %v179 = vadd.f32 %v156, %v177
  %v180 = vadd.f32 %v157, %v177
  %v181 = vadd.f32 %v158, %v177
  %v182 = vadd.f32 %v159, %v177
  %v183 = vadd.f32 %v160, %v177
  %v184 = vadd.f32 %v161, %v177
  %v185 = vadd.f32 %v162, %v177
  %v186 = vadd.f32 %v163, %v177
  %v187 = vadd.f32 %v164, %v177
  %v188 = vadd.f32 %v165, %v177
  %v189 = vadd.f32 %v166, %v177
  %v190 = vadd.f32 %v167, %v177
  %v191 = vadd.f32 %v168, %v177
  %v192 = vadd.f32 %v169, %v177
  %v193 = vadd.f32 %v170, %v177
  %v194 = vadd.f32 %v171, %v177
  %v195 = vadd.f32 %v101, %v179
  %v196 = vadd.f32 %v102, %v180
  %v197 = vadd.f32 %v103, %v181
  %v198 = vadd.f32 %v104, %v182
  %v199 = vadd.f32 %v105, %v183
  %v200 = vadd.f32 %v106, %v184
  %v201 = vadd.f32 %v107, %v185
  %v202 = vadd.f32 %v108, %v186
  %v203 = vadd.f32 %v109, %v187
  %v204 = vadd.f32 %v110, %v188
  %v205 = vadd.f32 %v111, %v189
  %v206 = vadd.f32 %v112, %v190
  %v207 = vadd.f32 %v113, %v191
  %v208 = vadd.f32 %v114, %v192
  %v209 = vadd.f32 %v115, %v193
  %v210 = vadd.f32 %v116, %v194
  %v211 = vmax.f32 %v195, 0.0
  %v212 = vmax.f32 %v196, 0.0
  %v213 = vmax.f32 %v197, 0.0
  %v214 = vmax.f32 %v198, 0.0
  %v215 = vmax.f32 %v199, 0.0
  %v216 = vmax.f32 %v200, 0.0
  %v217 = vmax.f32 %v201, 0.0
  %v218 = vmax.f32 %v202, 0.0
  %v219 = vmax.f32 %v203, 0.0
  %v220 = vmax.f32 %v204, 0.0
  %v221 = vmax.f32 %v205, 0.0
  %v222 = vmax.f32 %v206, 0.0
  %v223 = vmax.f32 %v207, 0.0
  %v224 = vmax.f32 %v208, 0.0
  %v225 = vmax.f32 %v209, 0.0
  %v226 = vmax.f32 %v210, 0.0
  %227 = vst [vmem:[%s6] sm:$0xff] %v211
  %228 = vst [vmem:[%s6 + $0x8] sm:$0xff] %v212
  %229 = vst [vmem:[%s6 + $0x10] sm:$0xff] %v213
  %230 = vst [vmem:[%s6 + $0x18] sm:$0xff] %v214
  %231 = vst [vmem:[%s6 + $0x20] sm:$0xff] %v215
  %232 = vst [vmem:[%s6 + $0x28] sm:$0xff] %v216
  %233 = vst [vmem:[%s6 + $0x30] sm:$0xff] %v217
  %234 = vst [vmem:[%s6 + $0x38] sm:$0xff] %v218
  %235 = vst [vmem:[%s6 + $0x40] sm:$0xff] %v219
  %236 = vst [vmem:[%s6 + $0x48] sm:$0xff] %v220
  %237 = vst [vmem:[%s6 + $0x50] sm:$0xff] %v221
  %238 = vst [vmem:[%s6 + $0x58] sm:$0xff] %v222
  %239 = vst [vmem:[%s6 + $0x60] sm:$0xff] %v223
  %240 = vst [vmem:[%s6 + $0x68] sm:$0xff] %v224
  %241 = vst [vmem:[%s6 + $0x70] sm:$0xff] %v225
  %242 = vst [vmem:[%s6 + $0x78] sm:$0xff] %v226
  // Predicated region
  $region26: #{basic_block_forward.7} parent=0 // pred_check
    _
  $region27: #{basic_block_forward.7} parent=0 // pred_check_branch
    %244 = sbr.rel (0) target = $region29
  $region28: #{basic_block_forward.7} parent=0 // pred_region
    _
  $region29: #{basic_block_forward.7} parent=0 // pred_fallthru
    _
  // Predicated region
  $region30: #{basic_block_forward.7} parent=0 // pred_check
    _
  $region31: #{basic_block_forward.7} parent=0 // pred_check_branch
    %246 = sbr.rel (0) target = $region33
  $region32: #{basic_block_forward.7} parent=0 // pred_region
    _
  $region33: #{basic_block_forward.7} parent=0 // pred_fallthru
    _

</llo_original>
